<compile_context>
chip_gen: v6e
topology: v6e:2x2x1
jax: 0.10.0
libtpu: 0.0.40
codegen_flags: <defaults>
</compile_context>

<pallas_src>
import jax
import jax.numpy as jnp
from jax.experimental import pallas as pl
from jax.experimental.pallas import tpu as pltpu

NZ = 1024                      # nz from the module (LSTM input_size)
N_WIDTH, N_HEIGHT = 4, 8       # undefined globals in the module -> pick small values
HIDDEN = N_WIDTH * N_HEIGHT    # hidden_size = n_width * n_height = 32
NUM_LAYERS = 2
SEQ = 8
BATCH = 2


def _lstm2_kernel(x_ref, wih0_ref, whh0_ref, b0_ref,
                  wih1_ref, whh1_ref, b1_ref,
                  y_ref, hn_ref, cn_ref):
    """Whole-sequence 2-layer LSTM, fully resident in VMEM (<1 MiB).

    x_ref    : (S*B, NZ)  bf16   (input, pre-flattened in the wrapper)
    wih0_ref : (NZ, 4H)   bf16   (W_ih_l0 pre-transposed)
    whh0_ref : (H, 4H)    bf16   (W_hh_l0 pre-transposed)
    b0_ref   : (1, 4H)    f32    (b_ih_l0 + b_hh_l0)
    wih1_ref : (H, 4H)    bf16   (W_ih_l1 pre-transposed)
    whh1_ref : (H, 4H)    bf16   (W_hh_l1 pre-transposed)
    b1_ref   : (1, 4H)    f32    (b_ih_l1 + b_hh_l1)
    y_ref    : (S, B, H)  f32
    hn_ref   : (2, B, H)  f32
    cn_ref   : (2, B, H)  f32
    """
    S, B, H = y_ref.shape
    f32 = jnp.float32
    bf16 = jnp.bfloat16

    # ---- hoisted layer-0 input projection: one big bf16 MXU matmul, bias folded ----
    pre0 = jnp.dot(x_ref[...], wih0_ref[...],
                   preferred_element_type=f32) + b0_ref[...]        # (S*B, 4H) f32

    whh0 = whh0_ref[...]
    wih1 = wih1_ref[...]
    whh1 = whh1_ref[...]
    b1 = jnp.broadcast_to(b1_ref[...], (B, 4 * H))                   # hoisted broadcast

    def activate(gates):
        # Whole-vreg EUP ops first, then static lane extraction of each gate.
        sig = jax.nn.sigmoid(gates)
        tnh = jnp.tanh(gates)
        i = sig[:, 0 * H:1 * H]
        f = sig[:, 1 * H:2 * H]
        g = tnh[:, 2 * H:3 * H]
        o = sig[:, 3 * H:4 * H]
        return i, f, g, o

    h0 = c0 = h1 = c1 = jnp.zeros((B, H), f32)
    h0b = h1b = jnp.zeros((B, H), bf16)      # bf16 copies of the state for the dots

    # Fully unrolled time loop (S is small and static).
    for t in range(S):
        # ---- layer 0: x-part precomputed, only the tiny recurrent dot remains ----
        g0 = pre0[t * B:(t + 1) * B, :] + jnp.dot(
            h0b, whh0, preferred_element_type=f32)
        i0, f0, gg0, o0 = activate(g0)
        c0 = f0 * c0 + i0 * gg0
        h0 = o0 * jnp.tanh(c0)
        h0b = h0.astype(bf16)

        # ---- layer 1 ----
        g1 = (jnp.dot(h0b, wih1, preferred_element_type=f32)
              + jnp.dot(h1b, whh1, preferred_element_type=f32)
              + b1)
        i1, f1, gg1, o1 = activate(g1)
        c1 = f1 * c1 + i1 * gg1
        h1 = o1 * jnp.tanh(c1)
        h1b = h1.astype(bf16)

        y_ref[t] = h1          # unrolling lets the scheduler hide these small stores

    hn_ref[0] = h0
    hn_ref[1] = h1
    cn_ref[0] = c0
    cn_ref[1] = c1


def prepare_params(params):
    """One-time parameter prep (transpose, bias folding, bf16 cast).

    Done at setup time so the per-call forward does no HBM-round-trip glue.
    """
    (wih0, whh0, bih0, bhh0, wih1, whh1, bih1, bhh1) = params
    wih0_t = jnp.transpose(wih0).astype(jnp.bfloat16)   # (NZ, 4H)
    whh0_t = jnp.transpose(whh0).astype(jnp.bfloat16)   # (H, 4H)
    wih1_t = jnp.transpose(wih1).astype(jnp.bfloat16)   # (H, 4H)
    whh1_t = jnp.transpose(whh1).astype(jnp.bfloat16)   # (H, 4H)
    b0 = (bih0 + bhh0).reshape(1, -1).astype(jnp.float32)   # (1, 4H)
    b1 = (bih1 + bhh1).reshape(1, -1).astype(jnp.float32)   # (1, 4H)
    return (wih0_t, whh0_t, b0, wih1_t, whh1_t, b1)


@jax.jit
def lstm_forward(x, prepped):
    """Equivalent of Network.forward(input) -> (output, (h_n, c_n))."""
    wih0_t, whh0_t, b0, wih1_t, whh1_t, b1 = prepped
    S, B, _ = x.shape
    H = whh0_t.shape[0]

    # Flatten (S, B, NZ) -> (S*B, NZ) (contiguous, free) and cast to bf16 for the
    # hoisted input projection.
    x2d = x.reshape(S * B, -1).astype(jnp.bfloat16)

    vmem = pl.BlockSpec(memory_space=pltpu.MemorySpace.VMEM)
    y, hn, cn = pl.pallas_call(
        _lstm2_kernel,
        out_shape=(jax.ShapeDtypeStruct((S, B, H), jnp.float32),
                   jax.ShapeDtypeStruct((NUM_LAYERS, B, H), jnp.float32),
                   jax.ShapeDtypeStruct((NUM_LAYERS, B, H), jnp.float32)),
        in_specs=[vmem] * 7,
        out_specs=(vmem, vmem, vmem),
    )(x2d, wih0_t, whh0_t, b0, wih1_t, whh1_t, b1)
    return y, (hn, cn)


def _reference_lstm(x, prepped):
    """Pure-JAX reference (PyTorch nn.LSTM recurrence) mirroring the kernel's
    mixed precision: bf16 matmul operands, f32 accumulation and gate math."""
    wih0_t, whh0_t, b0, wih1_t, whh1_t, b1 = prepped
    S, B, _ = x.shape
    H = whh0_t.shape[0]
    f32 = jnp.float32
    bf16 = jnp.bfloat16

    def cell(x_t, h, c, w_ih_t, w_hh_t, b):
        g = (jnp.dot(x_t.astype(bf16), w_ih_t, preferred_element_type=f32)
             + jnp.dot(h.astype(bf16), w_hh_t, preferred_element_type=f32)
             + b)
        i = jax.nn.sigmoid(g[:, 0 * H:1 * H])
        f = jax.nn.sigmoid(g[:, 1 * H:2 * H])
        gg = jnp.tanh(g[:, 2 * H:3 * H])
        o = jax.nn.sigmoid(g[:, 3 * H:4 * H])
        c = f * c + i * gg
        h = o * jnp.tanh(c)
        return h, c

    h0 = c0 = h1 = c1 = jnp.zeros((B, H), f32)
    ys = []
    for t in range(S):
        h0, c0 = cell(x[t], h0, c0, wih0_t, whh0_t, b0)
        h1, c1 = cell(h0, h1, c1, wih1_t, whh1_t, b1)
        ys.append(h1)
    y = jnp.stack(ys, axis=0)
    hn = jnp.stack([h0, h1], axis=0)
    cn = jnp.stack([c0, c1], axis=0)
    return y, (hn, cn)


def init_params(key):
    """PyTorch nn.LSTM default init: U(-1/sqrt(H), 1/sqrt(H)) for all params."""
    k = 1.0 / jnp.sqrt(jnp.float32(HIDDEN))
    shapes = [
        (4 * HIDDEN, NZ),       # weight_ih_l0
        (4 * HIDDEN, HIDDEN),   # weight_hh_l0
        (4 * HIDDEN,),          # bias_ih_l0
        (4 * HIDDEN,),          # bias_hh_l0
        (4 * HIDDEN, HIDDEN),   # weight_ih_l1
        (4 * HIDDEN, HIDDEN),   # weight_hh_l1
        (4 * HIDDEN,),          # bias_ih_l1
        (4 * HIDDEN,),          # bias_hh_l1
    ]
    keys = jax.random.split(key, len(shapes))
    return tuple(jax.random.uniform(kk, s, jnp.float32, -k, k)
                 for kk, s in zip(keys, shapes))


if __name__ == "__main__":
    key = jax.random.PRNGKey(0)
    k_x, k_p = jax.random.split(key)
    x = jax.random.normal(k_x, (SEQ, BATCH, NZ), jnp.float32)
    params = init_params(k_p)

    prepped = prepare_params(params)          # one-time weight prep (not per call)

    y, (hn, cn) = lstm_forward(x, prepped)
    jax.block_until_ready((y, hn, cn))

    y_ref, (hn_ref, cn_ref) = _reference_lstm(x, prepped)
    assert jnp.allclose(y, y_ref, atol=1e-3, rtol=1e-3)
    assert jnp.allclose(hn, hn_ref, atol=1e-3, rtol=1e-3)
    assert jnp.allclose(cn, cn_ref, atol=1e-3, rtol=1e-3)

    print("KERNEL_OK")
</pallas_src>

<mosaic_0001>
module attributes {stable_mosaic.version = 11 : i64} {
  func.func @_lstm2_kernel(%arg0: memref<16x1024xbf16, #tpu.memory_space<vmem>>, %arg1: memref<1024x128xbf16, #tpu.memory_space<vmem>>, %arg2: memref<32x128xbf16, #tpu.memory_space<vmem>>, %arg3: memref<1x128xf32, #tpu.memory_space<vmem>>, %arg4: memref<32x128xbf16, #tpu.memory_space<vmem>>, %arg5: memref<32x128xbf16, #tpu.memory_space<vmem>>, %arg6: memref<1x128xf32, #tpu.memory_space<vmem>>, %arg7: memref<8x2x32xf32, #tpu.memory_space<vmem>>, %arg8: memref<2x2x32xf32, #tpu.memory_space<vmem>>, %arg9: memref<2x2x32xf32, #tpu.memory_space<vmem>>) attributes {dimension_semantics = [], scalar_prefetch = 0 : i64, scratch_operands = 0 : i64, tpu.core_type = #tpu.core_type<tc>} {
    %c0 = arith.constant 0 : index
    %c0_0 = arith.constant 0 : index
    %0 = vector.load %arg0[%c0, %c0_0] : memref<16x1024xbf16, #tpu.memory_space<vmem>>, vector<16x1024xbf16>
    %c0_1 = arith.constant 0 : index
    %c0_2 = arith.constant 0 : index
    %1 = vector.load %arg1[%c0_1, %c0_2] : memref<1024x128xbf16, #tpu.memory_space<vmem>>, vector<1024x128xbf16>
    %cst = arith.constant dense<0.000000e+00> : vector<16x128xf32>
    %2 = tpu.matmul %0, %1, %cst {dimension_numbers = #tpu.dot_dimension_numbers<[1], [0], [0], [1], [0, 0, 1, 1], [], []>} : vector<16x1024xbf16>, vector<1024x128xbf16>, vector<16x128xf32> -> vector<16x128xf32>
    %c0_3 = arith.constant 0 : index
    %c0_4 = arith.constant 0 : index
    %3 = vector.load %arg3[%c0_3, %c0_4] : memref<1x128xf32, #tpu.memory_space<vmem>>, vector<1x128xf32>
    %4 = vector.broadcast %3 : vector<1x128xf32> to vector<16x128xf32>
    %5 = arith.addf %2, %4 : vector<16x128xf32>
    %c0_5 = arith.constant 0 : index
    %c0_6 = arith.constant 0 : index
    %6 = vector.load %arg2[%c0_5, %c0_6] : memref<32x128xbf16, #tpu.memory_space<vmem>>, vector<32x128xbf16>
    %c0_7 = arith.constant 0 : index
    %c0_8 = arith.constant 0 : index
    %7 = vector.load %arg4[%c0_7, %c0_8] : memref<32x128xbf16, #tpu.memory_space<vmem>>, vector<32x128xbf16>
    %c0_9 = arith.constant 0 : index
    %c0_10 = arith.constant 0 : index
    %8 = vector.load %arg5[%c0_9, %c0_10] : memref<32x128xbf16, #tpu.memory_space<vmem>>, vector<32x128xbf16>
    %c0_11 = arith.constant 0 : index
    %c0_12 = arith.constant 0 : index
    %9 = vector.load %arg6[%c0_11, %c0_12] : memref<1x128xf32, #tpu.memory_space<vmem>>, vector<1x128xf32>
    %10 = vector.shape_cast %9 : vector<1x128xf32> to vector<1x128xf32>
    %11 = vector.broadcast %10 : vector<1x128xf32> to vector<2x128xf32>
    %cst_13 = arith.constant 0.000000e+00 : f32
    %12 = vector.broadcast %cst_13 : f32 to vector<2x32xf32>
    %cst_14 = arith.constant 0.000000e+00 : bf16
    %13 = vector.broadcast %cst_14 : bf16 to vector<2x32xbf16>
    %14 = vector.extract_strided_slice %5 {offsets = [0, 0], sizes = [2, 128], strides = [1, 1]} : vector<16x128xf32> to vector<2x128xf32>
    %cst_15 = arith.constant dense<0.000000e+00> : vector<2x128xf32>
    %15 = tpu.matmul %13, %6, %cst_15 {dimension_numbers = #tpu.dot_dimension_numbers<[1], [0], [0], [1], [0, 0, 1, 1], [], []>} : vector<2x32xbf16>, vector<32x128xbf16>, vector<2x128xf32> -> vector<2x128xf32>
    %16 = arith.addf %14, %15 : vector<2x128xf32>
    %17 = arith.negf %16 : vector<2x128xf32>
    %18 = math.exp %17 : vector<2x128xf32>
    %cst_16 = arith.constant 1.000000e+00 : f32
    %19 = vector.broadcast %cst_16 : f32 to vector<2x128xf32>
    %20 = arith.addf %19, %18 : vector<2x128xf32>
    %21 = arith.divf %19, %20 : vector<2x128xf32>
    %22 = math.tanh %16 : vector<2x128xf32>
    %23 = vector.extract_strided_slice %21 {offsets = [0, 0], sizes = [2, 32], strides = [1, 1]} : vector<2x128xf32> to vector<2x32xf32>
    %24 = vector.extract_strided_slice %21 {offsets = [0, 32], sizes = [2, 32], strides = [1, 1]} : vector<2x128xf32> to vector<2x32xf32>
    %25 = vector.extract_strided_slice %22 {offsets = [0, 64], sizes = [2, 32], strides = [1, 1]} : vector<2x128xf32> to vector<2x32xf32>
    %26 = vector.extract_strided_slice %21 {offsets = [0, 96], sizes = [2, 32], strides = [1, 1]} : vector<2x128xf32> to vector<2x32xf32>
    %27 = arith.mulf %24, %12 : vector<2x32xf32>
    %28 = arith.mulf %23, %25 : vector<2x32xf32>
    %29 = arith.addf %27, %28 : vector<2x32xf32>
    %30 = math.tanh %29 : vector<2x32xf32>
    %31 = arith.mulf %26, %30 : vector<2x32xf32>
    %32 = arith.truncf %31 : vector<2x32xf32> to vector<2x32xbf16>
    %cst_17 = arith.constant dense<0.000000e+00> : vector<2x128xf32>
    %33 = tpu.matmul %32, %7, %cst_17 {dimension_numbers = #tpu.dot_dimension_numbers<[1], [0], [0], [1], [0, 0, 1, 1], [], []>} : vector<2x32xbf16>, vector<32x128xbf16>, vector<2x128xf32> -> vector<2x128xf32>
    %cst_18 = arith.constant dense<0.000000e+00> : vector<2x128xf32>
    %34 = tpu.matmul %13, %8, %cst_18 {dimension_numbers = #tpu.dot_dimension_numbers<[1], [0], [0], [1], [0, 0, 1, 1], [], []>} : vector<2x32xbf16>, vector<32x128xbf16>, vector<2x128xf32> -> vector<2x128xf32>
    %35 = arith.addf %33, %34 : vector<2x128xf32>
    %36 = arith.addf %35, %11 : vector<2x128xf32>
    %37 = arith.negf %36 : vector<2x128xf32>
    %38 = math.exp %37 : vector<2x128xf32>
    %cst_19 = arith.constant 1.000000e+00 : f32
    %39 = vector.broadcast %cst_19 : f32 to vector<2x128xf32>
    %40 = arith.addf %39, %38 : vector<2x128xf32>
    %41 = arith.divf %39, %40 : vector<2x128xf32>
    %42 = math.tanh %36 : vector<2x128xf32>
    %43 = vector.extract_strided_slice %41 {offsets = [0, 0], sizes = [2, 32], strides = [1, 1]} : vector<2x128xf32> to vector<2x32xf32>
    %44 = vector.extract_strided_slice %41 {offsets = [0, 32], sizes = [2, 32], strides = [1, 1]} : vector<2x128xf32> to vector<2x32xf32>
    %45 = vector.extract_strided_slice %42 {offsets = [0, 64], sizes = [2, 32], strides = [1, 1]} : vector<2x128xf32> to vector<2x32xf32>
    %46 = vector.extract_strided_slice %41 {offsets = [0, 96], sizes = [2, 32], strides = [1, 1]} : vector<2x128xf32> to vector<2x32xf32>
    %47 = arith.mulf %44, %12 : vector<2x32xf32>
    %48 = arith.mulf %43, %45 : vector<2x32xf32>
    %49 = arith.addf %47, %48 : vector<2x32xf32>
    %50 = math.tanh %49 : vector<2x32xf32>
    %51 = arith.mulf %46, %50 : vector<2x32xf32>
    %52 = arith.truncf %51 : vector<2x32xf32> to vector<2x32xbf16>
    %c0_20 = arith.constant 0 : index
    %c0_21 = arith.constant 0 : index
    %c0_22 = arith.constant 0 : index
    %53 = vector.load %arg7[%c0_20, %c0_21, %c0_22] : memref<8x2x32xf32, #tpu.memory_space<vmem>>, vector<1x2x32xf32>
    %54 = vector.shape_cast %53 : vector<1x2x32xf32> to vector<2x32xf32>
    %55 = vector.shape_cast %51 : vector<2x32xf32> to vector<1x2x32xf32>
    tpu.vector_store %arg7[%c0_20, %c0_21, %c0_22], %55 {strides = array<i32>} : memref<8x2x32xf32, #tpu.memory_space<vmem>>, vector<1x2x32xf32>,
    %56 = vector.extract_strided_slice %5 {offsets = [2, 0], sizes = [2, 128], strides = [1, 1]} : vector<16x128xf32> to vector<2x128xf32>
    %cst_23 = arith.constant dense<0.000000e+00> : vector<2x128xf32>
    %57 = tpu.matmul %32, %6, %cst_23 {dimension_numbers = #tpu.dot_dimension_numbers<[1], [0], [0], [1], [0, 0, 1, 1], [], []>} : vector<2x32xbf16>, vector<32x128xbf16>, vector<2x128xf32> -> vector<2x128xf32>
    %58 = arith.addf %56, %57 : vector<2x128xf32>
    %59 = arith.negf %58 : vector<2x128xf32>
    %60 = math.exp %59 : vector<2x128xf32>
    %cst_24 = arith.constant 1.000000e+00 : f32
    %61 = vector.broadcast %cst_24 : f32 to vector<2x128xf32>
    %62 = arith.addf %61, %60 : vector<2x128xf32>
    %63 = arith.divf %61, %62 : vector<2x128xf32>
    %64 = math.tanh %58 : vector<2x128xf32>
    %65 = vector.extract_strided_slice %63 {offsets = [0, 0], sizes = [2, 32], strides = [1, 1]} : vector<2x128xf32> to vector<2x32xf32>
    %66 = vector.extract_strided_slice %63 {offsets = [0, 32], sizes = [2, 32], strides = [1, 1]} : vector<2x128xf32> to vector<2x32xf32>
    %67 = vector.extract_strided_slice %64 {offsets = [0, 64], sizes = [2, 32], strides = [1, 1]} : vector<2x128xf32> to vector<2x32xf32>
    %68 = vector.extract_strided_slice %63 {offsets = [0, 96], sizes = [2, 32], strides = [1, 1]} : vector<2x128xf32> to vector<2x32xf32>
    %69 = arith.mulf %66, %29 : vector<2x32xf32>
    %70 = arith.mulf %65, %67 : vector<2x32xf32>
    %71 = arith.addf %69, %70 : vector<2x32xf32>
    %72 = math.tanh %71 : vector<2x32xf32>
    %73 = arith.mulf %68, %72 : vector<2x32xf32>
    %74 = arith.truncf %73 : vector<2x32xf32> to vector<2x32xbf16>
    %cst_25 = arith.constant dense<0.000000e+00> : vector<2x128xf32>
    %75 = tpu.matmul %74, %7, %cst_25 {dimension_numbers = #tpu.dot_dimension_numbers<[1], [0], [0], [1], [0, 0, 1, 1], [], []>} : vector<2x32xbf16>, vector<32x128xbf16>, vector<2x128xf32> -> vector<2x128xf32>
    %cst_26 = arith.constant dense<0.000000e+00> : vector<2x128xf32>
    %76 = tpu.matmul %52, %8, %cst_26 {dimension_numbers = #tpu.dot_dimension_numbers<[1], [0], [0], [1], [0, 0, 1, 1], [], []>} : vector<2x32xbf16>, vector<32x128xbf16>, vector<2x128xf32> -> vector<2x128xf32>
    %77 = arith.addf %75, %76 : vector<2x128xf32>
    %78 = arith.addf %77, %11 : vector<2x128xf32>
    %79 = arith.negf %78 : vector<2x128xf32>
    %80 = math.exp %79 : vector<2x128xf32>
    %cst_27 = arith.constant 1.000000e+00 : f32
    %81 = vector.broadcast %cst_27 : f32 to vector<2x128xf32>
    %82 = arith.addf %81, %80 : vector<2x128xf32>
    %83 = arith.divf %81, %82 : vector<2x128xf32>
    %84 = math.tanh %78 : vector<2x128xf32>
    %85 = vector.extract_strided_slice %83 {offsets = [0, 0], sizes = [2, 32], strides = [1, 1]} : vector<2x128xf32> to vector<2x32xf32>
    %86 = vector.extract_strided_slice %83 {offsets = [0, 32], sizes = [2, 32], strides = [1, 1]} : vector<2x128xf32> to vector<2x32xf32>
    %87 = vector.extract_strided_slice %84 {offsets = [0, 64], sizes = [2, 32], strides = [1, 1]} : vector<2x128xf32> to vector<2x32xf32>
    %88 = vector.extract_strided_slice %83 {offsets = [0, 96], sizes = [2, 32], strides = [1, 1]} : vector<2x128xf32> to vector<2x32xf32>
    %89 = arith.mulf %86, %49 : vector<2x32xf32>
    %90 = arith.mulf %85, %87 : vector<2x32xf32>
    %91 = arith.addf %89, %90 : vector<2x32xf32>
    %92 = math.tanh %91 : vector<2x32xf32>
    %93 = arith.mulf %88, %92 : vector<2x32xf32>
    %94 = arith.truncf %93 : vector<2x32xf32> to vector<2x32xbf16>
    %c1 = arith.constant 1 : index
    %c0_28 = arith.constant 0 : index
    %c0_29 = arith.constant 0 : index
    %95 = vector.load %arg7[%c1, %c0_28, %c0_29] : memref<8x2x32xf32, #tpu.memory_space<vmem>>, vector<1x2x32xf32>
    %96 = vector.shape_cast %95 : vector<1x2x32xf32> to vector<2x32xf32>
    %97 = vector.shape_cast %93 : vector<2x32xf32> to vector<1x2x32xf32>
    tpu.vector_store %arg7[%c1, %c0_28, %c0_29], %97 {strides = array<i32>} : memref<8x2x32xf32, #tpu.memory_space<vmem>>, vector<1x2x32xf32>,
    %98 = vector.extract_strided_slice %5 {offsets = [4, 0], sizes = [2, 128], strides = [1, 1]} : vector<16x128xf32> to vector<2x128xf32>
    %cst_30 = arith.constant dense<0.000000e+00> : vector<2x128xf32>
    %99 = tpu.matmul %74, %6, %cst_30 {dimension_numbers = #tpu.dot_dimension_numbers<[1], [0], [0], [1], [0, 0, 1, 1], [], []>} : vector<2x32xbf16>, vector<32x128xbf16>, vector<2x128xf32> -> vector<2x128xf32>
    %100 = arith.addf %98, %99 : vector<2x128xf32>
    %101 = arith.negf %100 : vector<2x128xf32>
    %102 = math.exp %101 : vector<2x128xf32>
    %cst_31 = arith.constant 1.000000e+00 : f32
    %103 = vector.broadcast %cst_31 : f32 to vector<2x128xf32>
    %104 = arith.addf %103, %102 : vector<2x128xf32>
    %105 = arith.divf %103, %104 : vector<2x128xf32>
    %106 = math.tanh %100 : vector<2x128xf32>
    %107 = vector.extract_strided_slice %105 {offsets = [0, 0], sizes = [2, 32], strides = [1, 1]} : vector<2x128xf32> to vector<2x32xf32>
    %108 = vector.extract_strided_slice %105 {offsets = [0, 32], sizes = [2, 32], strides = [1, 1]} : vector<2x128xf32> to vector<2x32xf32>
    %109 = vector.extract_strided_slice %106 {offsets = [0, 64], sizes = [2, 32], strides = [1, 1]} : vector<2x128xf32> to vector<2x32xf32>
    %110 = vector.extract_strided_slice %105 {offsets = [0, 96], sizes = [2, 32], strides = [1, 1]} : vector<2x128xf32> to vector<2x32xf32>
    %111 = arith.mulf %108, %71 : vector<2x32xf32>
    %112 = arith.mulf %107, %109 : vector<2x32xf32>
    %113 = arith.addf %111, %112 : vector<2x32xf32>
    %114 = math.tanh %113 : vector<2x32xf32>
    %115 = arith.mulf %110, %114 : vector<2x32xf32>
    %116 = arith.truncf %115 : vector<2x32xf32> to vector<2x32xbf16>
    %cst_32 = arith.constant dense<0.000000e+00> : vector<2x128xf32>
    %117 = tpu.matmul %116, %7, %cst_32 {dimension_numbers = #tpu.dot_dimension_numbers<[1], [0], [0], [1], [0, 0, 1, 1], [], []>} : vector<2x32xbf16>, vector<32x128xbf16>, vector<2x128xf32> -> vector<2x128xf32>
    %cst_33 = arith.constant dense<0.000000e+00> : vector<2x128xf32>
    %118 = tpu.matmul %94, %8, %cst_33 {dimension_numbers = #tpu.dot_dimension_numbers<[1], [0], [0], [1], [0, 0, 1, 1], [], []>} : vector<2x32xbf16>, vector<32x128xbf16>, vector<2x128xf32> -> vector<2x128xf32>
    %119 = arith.addf %117, %118 : vector<2x128xf32>
    %120 = arith.addf %119, %11 : vector<2x128xf32>
    %121 = arith.negf %120 : vector<2x128xf32>
    %122 = math.exp %121 : vector<2x128xf32>
    %cst_34 = arith.constant 1.000000e+00 : f32
    %123 = vector.broadcast %cst_34 : f32 to vector<2x128xf32>
    %124 = arith.addf %123, %122 : vector<2x128xf32>
    %125 = arith.divf %123, %124 : vector<2x128xf32>
    %126 = math.tanh %120 : vector<2x128xf32>
    %127 = vector.extract_strided_slice %125 {offsets = [0, 0], sizes = [2, 32], strides = [1, 1]} : vector<2x128xf32> to vector<2x32xf32>
    %128 = vector.extract_strided_slice %125 {offsets = [0, 32], sizes = [2, 32], strides = [1, 1]} : vector<2x128xf32> to vector<2x32xf32>
    %129 = vector.extract_strided_slice %126 {offsets = [0, 64], sizes = [2, 32], strides = [1, 1]} : vector<2x128xf32> to vector<2x32xf32>
    %130 = vector.extract_strided_slice %125 {offsets = [0, 96], sizes = [2, 32], strides = [1, 1]} : vector<2x128xf32> to vector<2x32xf32>
    %131 = arith.mulf %128, %91 : vector<2x32xf32>
    %132 = arith.mulf %127, %129 : vector<2x32xf32>
    %133 = arith.addf %131, %132 : vector<2x32xf32>
    %134 = math.tanh %133 : vector<2x32xf32>
    %135 = arith.mulf %130, %134 : vector<2x32xf32>
    %136 = arith.truncf %135 : vector<2x32xf32> to vector<2x32xbf16>
    %c2 = arith.constant 2 : index
    %c0_35 = arith.constant 0 : index
    %c0_36 = arith.constant 0 : index
    %137 = vector.load %arg7[%c2, %c0_35, %c0_36] : memref<8x2x32xf32, #tpu.memory_space<vmem>>, vector<1x2x32xf32>
    %138 = vector.shape_cast %137 : vector<1x2x32xf32> to vector<2x32xf32>
    %139 = vector.shape_cast %135 : vector<2x32xf32> to vector<1x2x32xf32>
    tpu.vector_store %arg7[%c2, %c0_35, %c0_36], %139 {strides = array<i32>} : memref<8x2x32xf32, #tpu.memory_space<vmem>>, vector<1x2x32xf32>,
    %140 = vector.extract_strided_slice %5 {offsets = [6, 0], sizes = [2, 128], strides = [1, 1]} : vector<16x128xf32> to vector<2x128xf32>
    %cst_37 = arith.constant dense<0.000000e+00> : vector<2x128xf32>
    %141 = tpu.matmul %116, %6, %cst_37 {dimension_numbers = #tpu.dot_dimension_numbers<[1], [0], [0], [1], [0, 0, 1, 1], [], []>} : vector<2x32xbf16>, vector<32x128xbf16>, vector<2x128xf32> -> vector<2x128xf32>
    %142 = arith.addf %140, %141 : vector<2x128xf32>
    %143 = arith.negf %142 : vector<2x128xf32>
    %144 = math.exp %143 : vector<2x128xf32>
    %cst_38 = arith.constant 1.000000e+00 : f32
    %145 = vector.broadcast %cst_38 : f32 to vector<2x128xf32>
    %146 = arith.addf %145, %144 : vector<2x128xf32>
    %147 = arith.divf %145, %146 : vector<2x128xf32>
    %148 = math.tanh %142 : vector<2x128xf32>
    %149 = vector.extract_strided_slice %147 {offsets = [0, 0], sizes = [2, 32], strides = [1, 1]} : vector<2x128xf32> to vector<2x32xf32>
    %150 = vector.extract_strided_slice %147 {offsets = [0, 32], sizes = [2, 32], strides = [1, 1]} : vector<2x128xf32> to vector<2x32xf32>
    %151 = vector.extract_strided_slice %148 {offsets = [0, 64], sizes = [2, 32], strides = [1, 1]} : vector<2x128xf32> to vector<2x32xf32>
    %152 = vector.extract_strided_slice %147 {offsets = [0, 96], sizes = [2, 32], strides = [1, 1]} : vector<2x128xf32> to vector<2x32xf32>
    %153 = arith.mulf %150, %113 : vector<2x32xf32>
    %154 = arith.mulf %149, %151 : vector<2x32xf32>
    %155 = arith.addf %153, %154 : vector<2x32xf32>
    %156 = math.tanh %155 : vector<2x32xf32>
    %157 = arith.mulf %152, %156 : vector<2x32xf32>
    %158 = arith.truncf %157 : vector<2x32xf32> to vector<2x32xbf16>
    %cst_39 = arith.constant dense<0.000000e+00> : vector<2x128xf32>
    %159 = tpu.matmul %158, %7, %cst_39 {dimension_numbers = #tpu.dot_dimension_numbers<[1], [0], [0], [1], [0, 0, 1, 1], [], []>} : vector<2x32xbf16>, vector<32x128xbf16>, vector<2x128xf32> -> vector<2x128xf32>
    %cst_40 = arith.constant dense<0.000000e+00> : vector<2x128xf32>
    %160 = tpu.matmul %136, %8, %cst_40 {dimension_numbers = #tpu.dot_dimension_numbers<[1], [0], [0], [1], [0, 0, 1, 1], [], []>} : vector<2x32xbf16>, vector<32x128xbf16>, vector<2x128xf32> -> vector<2x128xf32>
    %161 = arith.addf %159, %160 : vector<2x128xf32>
    %162 = arith.addf %161, %11 : vector<2x128xf32>
    %163 = arith.negf %162 : vector<2x128xf32>
    %164 = math.exp %163 : vector<2x128xf32>
    %cst_41 = arith.constant 1.000000e+00 : f32
    %165 = vector.broadcast %cst_41 : f32 to vector<2x128xf32>
    %166 = arith.addf %165, %164 : vector<2x128xf32>
    %167 = arith.divf %165, %166 : vector<2x128xf32>
    %168 = math.tanh %162 : vector<2x128xf32>
    %169 = vector.extract_strided_slice %167 {offsets = [0, 0], sizes = [2, 32], strides = [1, 1]} : vector<2x128xf32> to vector<2x32xf32>
    %170 = vector.extract_strided_slice %167 {offsets = [0, 32], sizes = [2, 32], strides = [1, 1]} : vector<2x128xf32> to vector<2x32xf32>
    %171 = vector.extract_strided_slice %168 {offsets = [0, 64], sizes = [2, 32], strides = [1, 1]} : vector<2x128xf32> to vector<2x32xf32>
    %172 = vector.extract_strided_slice %167 {offsets = [0, 96], sizes = [2, 32], strides = [1, 1]} : vector<2x128xf32> to vector<2x32xf32>
    %173 = arith.mulf %170, %133 : vector<2x32xf32>
    %174 = arith.mulf %169, %171 : vector<2x32xf32>
    %175 = arith.addf %173, %174 : vector<2x32xf32>
    %176 = math.tanh %175 : vector<2x32xf32>
    %177 = arith.mulf %172, %176 : vector<2x32xf32>
    %178 = arith.truncf %177 : vector<2x32xf32> to vector<2x32xbf16>
    %c3 = arith.constant 3 : index
    %c0_42 = arith.constant 0 : index
    %c0_43 = arith.constant 0 : index
    %179 = vector.load %arg7[%c3, %c0_42, %c0_43] : memref<8x2x32xf32, #tpu.memory_space<vmem>>, vector<1x2x32xf32>
    %180 = vector.shape_cast %179 : vector<1x2x32xf32> to vector<2x32xf32>
    %181 = vector.shape_cast %177 : vector<2x32xf32> to vector<1x2x32xf32>
    tpu.vector_store %arg7[%c3, %c0_42, %c0_43], %181 {strides = array<i32>} : memref<8x2x32xf32, #tpu.memory_space<vmem>>, vector<1x2x32xf32>,
    %182 = vector.extract_strided_slice %5 {offsets = [8, 0], sizes = [2, 128], strides = [1, 1]} : vector<16x128xf32> to vector<2x128xf32>
    %cst_44 = arith.constant dense<0.000000e+00> : vector<2x128xf32>
    %183 = tpu.matmul %158, %6, %cst_44 {dimension_numbers = #tpu.dot_dimension_numbers<[1], [0], [0], [1], [0, 0, 1, 1], [], []>} : vector<2x32xbf16>, vector<32x128xbf16>, vector<2x128xf32> -> vector<2x128xf32>
    %184 = arith.addf %182, %183 : vector<2x128xf32>
    %185 = arith.negf %184 : vector<2x128xf32>
    %186 = math.exp %185 : vector<2x128xf32>
    %cst_45 = arith.constant 1.000000e+00 : f32
    %187 = vector.broadcast %cst_45 : f32 to vector<2x128xf32>
    %188 = arith.addf %187, %186 : vector<2x128xf32>
    %189 = arith.divf %187, %188 : vector<2x128xf32>
    %190 = math.tanh %184 : vector<2x128xf32>
    %191 = vector.extract_strided_slice %189 {offsets = [0, 0], sizes = [2, 32], strides = [1, 1]} : vector<2x128xf32> to vector<2x32xf32>
    %192 = vector.extract_strided_slice %189 {offsets = [0, 32], sizes = [2, 32], strides = [1, 1]} : vector<2x128xf32> to vector<2x32xf32>
    %193 = vector.extract_strided_slice %190 {offsets = [0, 64], sizes = [2, 32], strides = [1, 1]} : vector<2x128xf32> to vector<2x32xf32>
    %194 = vector.extract_strided_slice %189 {offsets = [0, 96], sizes = [2, 32], strides = [1, 1]} : vector<2x128xf32> to vector<2x32xf32>
    %195 = arith.mulf %192, %155 : vector<2x32xf32>
    %196 = arith.mulf %191, %193 : vector<2x32xf32>
    %197 = arith.addf %195, %196 : vector<2x32xf32>
    %198 = math.tanh %197 : vector<2x32xf32>
    %199 = arith.mulf %194, %198 : vector<2x32xf32>
    %200 = arith.truncf %199 : vector<2x32xf32> to vector<2x32xbf16>
    %cst_46 = arith.constant dense<0.000000e+00> : vector<2x128xf32>
    %201 = tpu.matmul %200, %7, %cst_46 {dimension_numbers = #tpu.dot_dimension_numbers<[1], [0], [0], [1], [0, 0, 1, 1], [], []>} : vector<2x32xbf16>, vector<32x128xbf16>, vector<2x128xf32> -> vector<2x128xf32>
    %cst_47 = arith.constant dense<0.000000e+00> : vector<2x128xf32>
    %202 = tpu.matmul %178, %8, %cst_47 {dimension_numbers = #tpu.dot_dimension_numbers<[1], [0], [0], [1], [0, 0, 1, 1], [], []>} : vector<2x32xbf16>, vector<32x128xbf16>, vector<2x128xf32> -> vector<2x128xf32>
    %203 = arith.addf %201, %202 : vector<2x128xf32>
    %204 = arith.addf %203, %11 : vector<2x128xf32>
    %205 = arith.negf %204 : vector<2x128xf32>
    %206 = math.exp %205 : vector<2x128xf32>
    %cst_48 = arith.constant 1.000000e+00 : f32
    %207 = vector.broadcast %cst_48 : f32 to vector<2x128xf32>
    %208 = arith.addf %207, %206 : vector<2x128xf32>
    %209 = arith.divf %207, %208 : vector<2x128xf32>
    %210 = math.tanh %204 : vector<2x128xf32>
    %211 = vector.extract_strided_slice %209 {offsets = [0, 0], sizes = [2, 32], strides = [1, 1]} : vector<2x128xf32> to vector<2x32xf32>
    %212 = vector.extract_strided_slice %209 {offsets = [0, 32], sizes = [2, 32], strides = [1, 1]} : vector<2x128xf32> to vector<2x32xf32>
    %213 = vector.extract_strided_slice %210 {offsets = [0, 64], sizes = [2, 32], strides = [1, 1]} : vector<2x128xf32> to vector<2x32xf32>
    %214 = vector.extract_strided_slice %209 {offsets = [0, 96], sizes = [2, 32], strides = [1, 1]} : vector<2x128xf32> to vector<2x32xf32>
    %215 = arith.mulf %212, %175 : vector<2x32xf32>
    %216 = arith.mulf %211, %213 : vector<2x32xf32>
    %217 = arith.addf %215, %216 : vector<2x32xf32>
    %218 = math.tanh %217 : vector<2x32xf32>
    %219 = arith.mulf %214, %218 : vector<2x32xf32>
    %220 = arith.truncf %219 : vector<2x32xf32> to vector<2x32xbf16>
    %c4 = arith.constant 4 : index
    %c0_49 = arith.constant 0 : index
    %c0_50 = arith.constant 0 : index
    %221 = vector.load %arg7[%c4, %c0_49, %c0_50] : memref<8x2x32xf32, #tpu.memory_space<vmem>>, vector<1x2x32xf32>
    %222 = vector.shape_cast %221 : vector<1x2x32xf32> to vector<2x32xf32>
    %223 = vector.shape_cast %219 : vector<2x32xf32> to vector<1x2x32xf32>
    tpu.vector_store %arg7[%c4, %c0_49, %c0_50], %223 {strides = array<i32>} : memref<8x2x32xf32, #tpu.memory_space<vmem>>, vector<1x2x32xf32>,
    %224 = vector.extract_strided_slice %5 {offsets = [10, 0], sizes = [2, 128], strides = [1, 1]} : vector<16x128xf32> to vector<2x128xf32>
    %cst_51 = arith.constant dense<0.000000e+00> : vector<2x128xf32>
    %225 = tpu.matmul %200, %6, %cst_51 {dimension_numbers = #tpu.dot_dimension_numbers<[1], [0], [0], [1], [0, 0, 1, 1], [], []>} : vector<2x32xbf16>, vector<32x128xbf16>, vector<2x128xf32> -> vector<2x128xf32>
    %226 = arith.addf %224, %225 : vector<2x128xf32>
    %227 = arith.negf %226 : vector<2x128xf32>
    %228 = math.exp %227 : vector<2x128xf32>
    %cst_52 = arith.constant 1.000000e+00 : f32
    %229 = vector.broadcast %cst_52 : f32 to vector<2x128xf32>
    %230 = arith.addf %229, %228 : vector<2x128xf32>
    %231 = arith.divf %229, %230 : vector<2x128xf32>
    %232 = math.tanh %226 : vector<2x128xf32>
    %233 = vector.extract_strided_slice %231 {offsets = [0, 0], sizes = [2, 32], strides = [1, 1]} : vector<2x128xf32> to vector<2x32xf32>
    %234 = vector.extract_strided_slice %231 {offsets = [0, 32], sizes = [2, 32], strides = [1, 1]} : vector<2x128xf32> to vector<2x32xf32>
    %235 = vector.extract_strided_slice %232 {offsets = [0, 64], sizes = [2, 32], strides = [1, 1]} : vector<2x128xf32> to vector<2x32xf32>
    %236 = vector.extract_strided_slice %231 {offsets = [0, 96], sizes = [2, 32], strides = [1, 1]} : vector<2x128xf32> to vector<2x32xf32>
    %237 = arith.mulf %234, %197 : vector<2x32xf32>
    %238 = arith.mulf %233, %235 : vector<2x32xf32>
    %239 = arith.addf %237, %238 : vector<2x32xf32>
    %240 = math.tanh %239 : vector<2x32xf32>
    %241 = arith.mulf %236, %240 : vector<2x32xf32>
    %242 = arith.truncf %241 : vector<2x32xf32> to vector<2x32xbf16>
    %cst_53 = arith.constant dense<0.000000e+00> : vector<2x128xf32>
    %243 = tpu.matmul %242, %7, %cst_53 {dimension_numbers = #tpu.dot_dimension_numbers<[1], [0], [0], [1], [0, 0, 1, 1], [], []>} : vector<2x32xbf16>, vector<32x128xbf16>, vector<2x128xf32> -> vector<2x128xf32>
    %cst_54 = arith.constant dense<0.000000e+00> : vector<2x128xf32>
    %244 = tpu.matmul %220, %8, %cst_54 {dimension_numbers = #tpu.dot_dimension_numbers<[1], [0], [0], [1], [0, 0, 1, 1], [], []>} : vector<2x32xbf16>, vector<32x128xbf16>, vector<2x128xf32> -> vector<2x128xf32>
    %245 = arith.addf %243, %244 : vector<2x128xf32>
    %246 = arith.addf %245, %11 : vector<2x128xf32>
    %247 = arith.negf %246 : vector<2x128xf32>
    %248 = math.exp %247 : vector<2x128xf32>
    %cst_55 = arith.constant 1.000000e+00 : f32
    %249 = vector.broadcast %cst_55 : f32 to vector<2x128xf32>
    %250 = arith.addf %249, %248 : vector<2x128xf32>
    %251 = arith.divf %249, %250 : vector<2x128xf32>
    %252 = math.tanh %246 : vector<2x128xf32>
    %253 = vector.extract_strided_slice %251 {offsets = [0, 0], sizes = [2, 32], strides = [1, 1]} : vector<2x128xf32> to vector<2x32xf32>
    %254 = vector.extract_strided_slice %251 {offsets = [0, 32], sizes = [2, 32], strides = [1, 1]} : vector<2x128xf32> to vector<2x32xf32>
    %255 = vector.extract_strided_slice %252 {offsets = [0, 64], sizes = [2, 32], strides = [1, 1]} : vector<2x128xf32> to vector<2x32xf32>
    %256 = vector.extract_strided_slice %251 {offsets = [0, 96], sizes = [2, 32], strides = [1, 1]} : vector<2x128xf32> to vector<2x32xf32>
    %257 = arith.mulf %254, %217 : vector<2x32xf32>
    %258 = arith.mulf %253, %255 : vector<2x32xf32>
    %259 = arith.addf %257, %258 : vector<2x32xf32>
    %260 = math.tanh %259 : vector<2x32xf32>
    %261 = arith.mulf %256, %260 : vector<2x32xf32>
    %262 = arith.truncf %261 : vector<2x32xf32> to vector<2x32xbf16>
    %c5 = arith.constant 5 : index
    %c0_56 = arith.constant 0 : index
    %c0_57 = arith.constant 0 : index
    %263 = vector.load %arg7[%c5, %c0_56, %c0_57] : memref<8x2x32xf32, #tpu.memory_space<vmem>>, vector<1x2x32xf32>
    %264 = vector.shape_cast %263 : vector<1x2x32xf32> to vector<2x32xf32>
    %265 = vector.shape_cast %261 : vector<2x32xf32> to vector<1x2x32xf32>
    tpu.vector_store %arg7[%c5, %c0_56, %c0_57], %265 {strides = array<i32>} : memref<8x2x32xf32, #tpu.memory_space<vmem>>, vector<1x2x32xf32>,
    %266 = vector.extract_strided_slice %5 {offsets = [12, 0], sizes = [2, 128], strides = [1, 1]} : vector<16x128xf32> to vector<2x128xf32>
    %cst_58 = arith.constant dense<0.000000e+00> : vector<2x128xf32>
    %267 = tpu.matmul %242, %6, %cst_58 {dimension_numbers = #tpu.dot_dimension_numbers<[1], [0], [0], [1], [0, 0, 1, 1], [], []>} : vector<2x32xbf16>, vector<32x128xbf16>, vector<2x128xf32> -> vector<2x128xf32>
    %268 = arith.addf %266, %267 : vector<2x128xf32>
    %269 = arith.negf %268 : vector<2x128xf32>
    %270 = math.exp %269 : vector<2x128xf32>
    %cst_59 = arith.constant 1.000000e+00 : f32
    %271 = vector.broadcast %cst_59 : f32 to vector<2x128xf32>
    %272 = arith.addf %271, %270 : vector<2x128xf32>
    %273 = arith.divf %271, %272 : vector<2x128xf32>
    %274 = math.tanh %268 : vector<2x128xf32>
    %275 = vector.extract_strided_slice %273 {offsets = [0, 0], sizes = [2, 32], strides = [1, 1]} : vector<2x128xf32> to vector<2x32xf32>
    %276 = vector.extract_strided_slice %273 {offsets = [0, 32], sizes = [2, 32], strides = [1, 1]} : vector<2x128xf32> to vector<2x32xf32>
    %277 = vector.extract_strided_slice %274 {offsets = [0, 64], sizes = [2, 32], strides = [1, 1]} : vector<2x128xf32> to vector<2x32xf32>
    %278 = vector.extract_strided_slice %273 {offsets = [0, 96], sizes = [2, 32], strides = [1, 1]} : vector<2x128xf32> to vector<2x32xf32>
    %279 = arith.mulf %276, %239 : vector<2x32xf32>
    %280 = arith.mulf %275, %277 : vector<2x32xf32>
    %281 = arith.addf %279, %280 : vector<2x32xf32>
    %282 = math.tanh %281 : vector<2x32xf32>
    %283 = arith.mulf %278, %282 : vector<2x32xf32>
    %284 = arith.truncf %283 : vector<2x32xf32> to vector<2x32xbf16>
    %cst_60 = arith.constant dense<0.000000e+00> : vector<2x128xf32>
    %285 = tpu.matmul %284, %7, %cst_60 {dimension_numbers = #tpu.dot_dimension_numbers<[1], [0], [0], [1], [0, 0, 1, 1], [], []>} : vector<2x32xbf16>, vector<32x128xbf16>, vector<2x128xf32> -> vector<2x128xf32>
    %cst_61 = arith.constant dense<0.000000e+00> : vector<2x128xf32>
    %286 = tpu.matmul %262, %8, %cst_61 {dimension_numbers = #tpu.dot_dimension_numbers<[1], [0], [0], [1], [0, 0, 1, 1], [], []>} : vector<2x32xbf16>, vector<32x128xbf16>, vector<2x128xf32> -> vector<2x128xf32>
    %287 = arith.addf %285, %286 : vector<2x128xf32>
    %288 = arith.addf %287, %11 : vector<2x128xf32>
    %289 = arith.negf %288 : vector<2x128xf32>
    %290 = math.exp %289 : vector<2x128xf32>
    %cst_62 = arith.constant 1.000000e+00 : f32
    %291 = vector.broadcast %cst_62 : f32 to vector<2x128xf32>
    %292 = arith.addf %291, %290 : vector<2x128xf32>
    %293 = arith.divf %291, %292 : vector<2x128xf32>
    %294 = math.tanh %288 : vector<2x128xf32>
    %295 = vector.extract_strided_slice %293 {offsets = [0, 0], sizes = [2, 32], strides = [1, 1]} : vector<2x128xf32> to vector<2x32xf32>
    %296 = vector.extract_strided_slice %293 {offsets = [0, 32], sizes = [2, 32], strides = [1, 1]} : vector<2x128xf32> to vector<2x32xf32>
    %297 = vector.extract_strided_slice %294 {offsets = [0, 64], sizes = [2, 32], strides = [1, 1]} : vector<2x128xf32> to vector<2x32xf32>
    %298 = vector.extract_strided_slice %293 {offsets = [0, 96], sizes = [2, 32], strides = [1, 1]} : vector<2x128xf32> to vector<2x32xf32>
    %299 = arith.mulf %296, %259 : vector<2x32xf32>
    %300 = arith.mulf %295, %297 : vector<2x32xf32>
    %301 = arith.addf %299, %300 : vector<2x32xf32>
    %302 = math.tanh %301 : vector<2x32xf32>
    %303 = arith.mulf %298, %302 : vector<2x32xf32>
    %304 = arith.truncf %303 : vector<2x32xf32> to vector<2x32xbf16>
    %c6 = arith.constant 6 : index
    %c0_63 = arith.constant 0 : index
    %c0_64 = arith.constant 0 : index
    %305 = vector.load %arg7[%c6, %c0_63, %c0_64] : memref<8x2x32xf32, #tpu.memory_space<vmem>>, vector<1x2x32xf32>
    %306 = vector.shape_cast %305 : vector<1x2x32xf32> to vector<2x32xf32>
    %307 = vector.shape_cast %303 : vector<2x32xf32> to vector<1x2x32xf32>
    tpu.vector_store %arg7[%c6, %c0_63, %c0_64], %307 {strides = array<i32>} : memref<8x2x32xf32, #tpu.memory_space<vmem>>, vector<1x2x32xf32>,
    %308 = vector.extract_strided_slice %5 {offsets = [14, 0], sizes = [2, 128], strides = [1, 1]} : vector<16x128xf32> to vector<2x128xf32>
    %cst_65 = arith.constant dense<0.000000e+00> : vector<2x128xf32>
    %309 = tpu.matmul %284, %6, %cst_65 {dimension_numbers = #tpu.dot_dimension_numbers<[1], [0], [0], [1], [0, 0, 1, 1], [], []>} : vector<2x32xbf16>, vector<32x128xbf16>, vector<2x128xf32> -> vector<2x128xf32>
    %310 = arith.addf %308, %309 : vector<2x128xf32>
    %311 = arith.negf %310 : vector<2x128xf32>
    %312 = math.exp %311 : vector<2x128xf32>
    %cst_66 = arith.constant 1.000000e+00 : f32
    %313 = vector.broadcast %cst_66 : f32 to vector<2x128xf32>
    %314 = arith.addf %313, %312 : vector<2x128xf32>
    %315 = arith.divf %313, %314 : vector<2x128xf32>
    %316 = math.tanh %310 : vector<2x128xf32>
    %317 = vector.extract_strided_slice %315 {offsets = [0, 0], sizes = [2, 32], strides = [1, 1]} : vector<2x128xf32> to vector<2x32xf32>
    %318 = vector.extract_strided_slice %315 {offsets = [0, 32], sizes = [2, 32], strides = [1, 1]} : vector<2x128xf32> to vector<2x32xf32>
    %319 = vector.extract_strided_slice %316 {offsets = [0, 64], sizes = [2, 32], strides = [1, 1]} : vector<2x128xf32> to vector<2x32xf32>
    %320 = vector.extract_strided_slice %315 {offsets = [0, 96], sizes = [2, 32], strides = [1, 1]} : vector<2x128xf32> to vector<2x32xf32>
    %321 = arith.mulf %318, %281 : vector<2x32xf32>
    %322 = arith.mulf %317, %319 : vector<2x32xf32>
    %323 = arith.addf %321, %322 : vector<2x32xf32>
    %324 = math.tanh %323 : vector<2x32xf32>
    %325 = arith.mulf %320, %324 : vector<2x32xf32>
    %326 = arith.truncf %325 : vector<2x32xf32> to vector<2x32xbf16>
    %cst_67 = arith.constant dense<0.000000e+00> : vector<2x128xf32>
    %327 = tpu.matmul %326, %7, %cst_67 {dimension_numbers = #tpu.dot_dimension_numbers<[1], [0], [0], [1], [0, 0, 1, 1], [], []>} : vector<2x32xbf16>, vector<32x128xbf16>, vector<2x128xf32> -> vector<2x128xf32>
    %cst_68 = arith.constant dense<0.000000e+00> : vector<2x128xf32>
    %328 = tpu.matmul %304, %8, %cst_68 {dimension_numbers = #tpu.dot_dimension_numbers<[1], [0], [0], [1], [0, 0, 1, 1], [], []>} : vector<2x32xbf16>, vector<32x128xbf16>, vector<2x128xf32> -> vector<2x128xf32>
    %329 = arith.addf %327, %328 : vector<2x128xf32>
    %330 = arith.addf %329, %11 : vector<2x128xf32>
    %331 = arith.negf %330 : vector<2x128xf32>
    %332 = math.exp %331 : vector<2x128xf32>
    %cst_69 = arith.constant 1.000000e+00 : f32
    %333 = vector.broadcast %cst_69 : f32 to vector<2x128xf32>
    %334 = arith.addf %333, %332 : vector<2x128xf32>
    %335 = arith.divf %333, %334 : vector<2x128xf32>
    %336 = math.tanh %330 : vector<2x128xf32>
    %337 = vector.extract_strided_slice %335 {offsets = [0, 0], sizes = [2, 32], strides = [1, 1]} : vector<2x128xf32> to vector<2x32xf32>
    %338 = vector.extract_strided_slice %335 {offsets = [0, 32], sizes = [2, 32], strides = [1, 1]} : vector<2x128xf32> to vector<2x32xf32>
    %339 = vector.extract_strided_slice %336 {offsets = [0, 64], sizes = [2, 32], strides = [1, 1]} : vector<2x128xf32> to vector<2x32xf32>
    %340 = vector.extract_strided_slice %335 {offsets = [0, 96], sizes = [2, 32], strides = [1, 1]} : vector<2x128xf32> to vector<2x32xf32>
    %341 = arith.mulf %338, %301 : vector<2x32xf32>
    %342 = arith.mulf %337, %339 : vector<2x32xf32>
    %343 = arith.addf %341, %342 : vector<2x32xf32>
    %344 = math.tanh %343 : vector<2x32xf32>
    %345 = arith.mulf %340, %344 : vector<2x32xf32>
    %c7 = arith.constant 7 : index
    %c0_70 = arith.constant 0 : index
    %c0_71 = arith.constant 0 : index
    %346 = vector.load %arg7[%c7, %c0_70, %c0_71] : memref<8x2x32xf32, #tpu.memory_space<vmem>>, vector<1x2x32xf32>
    %347 = vector.shape_cast %346 : vector<1x2x32xf32> to vector<2x32xf32>
    %348 = vector.shape_cast %345 : vector<2x32xf32> to vector<1x2x32xf32>
    tpu.vector_store %arg7[%c7, %c0_70, %c0_71], %348 {strides = array<i32>} : memref<8x2x32xf32, #tpu.memory_space<vmem>>, vector<1x2x32xf32>,
    %c0_72 = arith.constant 0 : index
    %c0_73 = arith.constant 0 : index
    %c0_74 = arith.constant 0 : index
    %349 = vector.load %arg8[%c0_72, %c0_73, %c0_74] : memref<2x2x32xf32, #tpu.memory_space<vmem>>, vector<1x2x32xf32>
    %350 = vector.shape_cast %349 : vector<1x2x32xf32> to vector<2x32xf32>
    %351 = vector.shape_cast %325 : vector<2x32xf32> to vector<1x2x32xf32>
    tpu.vector_store %arg8[%c0_72, %c0_73, %c0_74], %351 {strides = array<i32>} : memref<2x2x32xf32, #tpu.memory_space<vmem>>, vector<1x2x32xf32>,
    %c1_75 = arith.constant 1 : index
    %c0_76 = arith.constant 0 : index
    %c0_77 = arith.constant 0 : index
    %352 = vector.load %arg8[%c1_75, %c0_76, %c0_77] : memref<2x2x32xf32, #tpu.memory_space<vmem>>, vector<1x2x32xf32>
    %353 = vector.shape_cast %352 : vector<1x2x32xf32> to vector<2x32xf32>
    %354 = vector.shape_cast %345 : vector<2x32xf32> to vector<1x2x32xf32>
    tpu.vector_store %arg8[%c1_75, %c0_76, %c0_77], %354 {strides = array<i32>} : memref<2x2x32xf32, #tpu.memory_space<vmem>>, vector<1x2x32xf32>,
    %c0_78 = arith.constant 0 : index
    %c0_79 = arith.constant 0 : index
    %c0_80 = arith.constant 0 : index
    %355 = vector.load %arg9[%c0_78, %c0_79, %c0_80] : memref<2x2x32xf32, #tpu.memory_space<vmem>>, vector<1x2x32xf32>
    %356 = vector.shape_cast %355 : vector<1x2x32xf32> to vector<2x32xf32>
    %357 = vector.shape_cast %323 : vector<2x32xf32> to vector<1x2x32xf32>
    tpu.vector_store %arg9[%c0_78, %c0_79, %c0_80], %357 {strides = array<i32>} : memref<2x2x32xf32, #tpu.memory_space<vmem>>, vector<1x2x32xf32>,
    %c1_81 = arith.constant 1 : index
    %c0_82 = arith.constant 0 : index
    %c0_83 = arith.constant 0 : index
    %358 = vector.load %arg9[%c1_81, %c0_82, %c0_83] : memref<2x2x32xf32, #tpu.memory_space<vmem>>, vector<1x2x32xf32>
    %359 = vector.shape_cast %358 : vector<1x2x32xf32> to vector<2x32xf32>
    %360 = vector.shape_cast %343 : vector<2x32xf32> to vector<1x2x32xf32>
    tpu.vector_store %arg9[%c1_81, %c0_82, %c0_83], %360 {strides = array<i32>} : memref<2x2x32xf32, #tpu.memory_space<vmem>>, vector<1x2x32xf32>,
    return
  }
}

</mosaic_0001>

<llo_original>
// kernel: lstm_forward.1
$region0: #{lstm_forward.1}
  #allocation0 [shape = 'u32[]', space=smem, size = 0x4, offset = 0x4, fixed_abs, tag = 'smem constant byte address 0x4 - core index']
  #allocation1 [shape = 'u32[144,128]{1,0:T(1,128)}', space=vmem, size = 0x12000, scoped, tag = 'internal scratch']
  %s0 = inlined_call_operand.vmem [shape: bf16[16,1024], index: 0, kind: input, shape index: {}]
  %s1 = inlined_call_operand.hbm [shape: bf16[1024,128], index: 1, kind: input, shape index: {}]
  %s2 = inlined_call_operand.vmem [shape: bf16[32,128], index: 2, kind: input, shape index: {}]
  %s3 = inlined_call_operand.vmem [shape: f32[1,128], index: 3, kind: input, shape index: {}]
  %s4 = inlined_call_operand.vmem [shape: bf16[32,128], index: 4, kind: input, shape index: {}]
  %s5 = inlined_call_operand.vmem [shape: bf16[32,128], index: 5, kind: input, shape index: {}]
  %s6 = inlined_call_operand.vmem [shape: f32[1,128], index: 6, kind: input, shape index: {}]
  %s7 = inlined_call_operand.hbm [shape: f32[8,2,32], index: 7, kind: output, shape index: {0}]
  %s8 = inlined_call_operand.hbm [shape: f32[2,2,32], index: 8, kind: output, shape index: {1}]
  %s9 = inlined_call_operand.hbm [shape: f32[2,2,32], index: 9, kind: output, shape index: {2}]
  %10 = xla_tuple %s7, %s8, %s9
  %s11 = sld [smem:[#allocation0]]
  $region58: #{lstm_forward.1} parent=0
    _
  %s13 = ssub.s32 1, %s11
  %s14 = scalar_select 0, %s13, %s11
  $region1: #{lstm_forward.1} parent=0
    #allocation2 [shape = 'u8[262144]{0}', space=vmem, size = 0x40000, scoped, tag = 'input window, operand 1, single buffered']
    #allocation3 [shape = 's32[1]{0}', space=sflag, size = 0x4, scoped, tag = 'scoped memory for lstm_forward.1']
    #allocation4 [shape = 's32[1]{0}', space=sflag, size = 0x4, scoped, tag = 'scoped memory for lstm_forward.1']
    #allocation5 [shape = 'u8[8192]{0}', space=vmem, size = 0x2000, scoped, tag = 'output window, operand 0, single buffered']
    #allocation6 [shape = 'u8[2048]{0}', space=vmem, size = 0x800, scoped, tag = 'output window, operand 1, single buffered']
    #allocation7 [shape = 's32[1]{0}', space=sflag, size = 0x4, scoped, tag = 'scoped memory for lstm_forward.1']
    #allocation8 [shape = 'u8[2048]{0}', space=vmem, size = 0x800, scoped, tag = 'output window, operand 2, single buffered']
    %15 = vsyncpa [#allocation3], 0
    %16 = vsyncpa [#allocation4], 0
    %17 = vsyncpa [#allocation7], 0
    // Predicated region
    $region2: #{lstm_forward.1} parent=1 // pred_check
      _
    $region3: #{lstm_forward.1} parent=1 // pred_check_branch
      %19 = sbr.rel (0) target = $region5
    $region4: #{lstm_forward.1} parent=1 // pred_region
      _
    $region5: #{lstm_forward.1} parent=1 // pred_fallthru
      _
    // Predicated region
    $region6: #{lstm_forward.1} parent=1 // pred_check
      _
    $region7: #{lstm_forward.1} parent=1 // pred_check_branch
      %21 = sbr.rel (0) target = $region9
    $region8: #{lstm_forward.1} parent=1 // pred_region
      %s23 = ssub.s32 8192, 8192
      %24 = vsyncadd [#allocation3], %s23
      %s25 = sshll.u32 [#allocation2], 4
      %s26 = int_to_ptr.vmem [resolvable:$true] %s25
      %31 = dma.hbm_to_vmem [thread:$0]  %s1, 8192, %s26, [#allocation3], 64, 64, 4
    $region9: #{lstm_forward.1} parent=1 // pred_fallthru
      _
    // Predicated region
    $region10: #{lstm_forward.1} parent=1 // pred_check
      _
    $region11: #{lstm_forward.1} parent=1 // pred_check_branch
      %33 = sbr.rel (0) target = $region13
    $region12: #{lstm_forward.1} parent=1 // pred_region
      _
    $region13: #{lstm_forward.1} parent=1 // pred_fallthru
      _
    // Predicated region
    $region14: #{lstm_forward.1} parent=1 // pred_check
      _
    $region15: #{lstm_forward.1} parent=1 // pred_check_branch
      %35 = sbr.rel (0) target = $region17
    $region16: #{lstm_forward.1} parent=1 // pred_region
      _
    $region17: #{lstm_forward.1} parent=1 // pred_fallthru
      _
    // Predicated region
    $region18: #{lstm_forward.1} parent=1 // pred_check
      _
    $region19: #{lstm_forward.1} parent=1 // pred_check_branch
      %37 = sbr.rel (0) target = $region21
    $region20: #{lstm_forward.1} parent=1 // pred_region
      _
    $region21: #{lstm_forward.1} parent=1 // pred_fallthru
      _
    // Predicated region
    $region22: #{lstm_forward.1} parent=1 // pred_check
      _
    $region23: #{lstm_forward.1} parent=1 // pred_check_branch
      %39 = sbr.rel (0) target = $region25
    $region24: #{lstm_forward.1} parent=1 // pred_region
      _
    $region25: #{lstm_forward.1} parent=1 // pred_fallthru
      _
    // Predicated region
    $region26: #{lstm_forward.1} parent=1 // pred_check
      _
    $region27: #{lstm_forward.1} parent=1 // pred_check_branch
      %41 = sbr.rel (0) target = $region29
    $region28: #{lstm_forward.1} parent=1 // pred_region
      _
    $region29: #{lstm_forward.1} parent=1 // pred_fallthru
      _
    // Predicated region
    $region30: #{lstm_forward.1} parent=1 // pred_check
      _
    $region31: #{lstm_forward.1} parent=1 // pred_check_branch
      %43 = sbr.rel (0) target = $region33
    $region32: #{lstm_forward.1} parent=1 // pred_region
      %44 = dma.done [#allocation3], 8192
    $region33: #{lstm_forward.1} parent=1 // pred_fallthru
      _
    %v46 = vld [vmem:[%s0] sm:$0xff]
    %v47 = vld [vmem:[%s0 + $0x8] sm:$0xff]
    %v48 = vld [vmem:[%s0 + $0x10] sm:$0xff]
    %v49 = vld [vmem:[%s0 + $0x18] sm:$0xff]
    %v50 = vld [vmem:[%s0 + $0x20] sm:$0xff]
    %v51 = vld [vmem:[%s0 + $0x28] sm:$0xff]
    %v52 = vld [vmem:[%s0 + $0x30] sm:$0xff]
    %v53 = vld [vmem:[%s0 + $0x38] sm:$0xff]
    %v54 = vld [vmem:[#allocation2] sm:$0xf]
    %v55 = vld [vmem:[#allocation2 + $0x4] sm:$0xf]
    %v56 = vld [vmem:[#allocation2 + $0x8] sm:$0xf]
    %v57 = vld [vmem:[#allocation2 + $0xc] sm:$0xf]
    %v58 = vld [vmem:[#allocation2 + $0x10] sm:$0xf]
    %v59 = vld [vmem:[#allocation2 + $0x14] sm:$0xf]
    %v60 = vld [vmem:[#allocation2 + $0x18] sm:$0xf]
    %v61 = vld [vmem:[#allocation2 + $0x1c] sm:$0xf]
    %v62 = vld [vmem:[#allocation2 + $0x20] sm:$0xf]
    %v63 = vld [vmem:[#allocation2 + $0x24] sm:$0xf]
    %v64 = vld [vmem:[#allocation2 + $0x28] sm:$0xf]
    %v65 = vld [vmem:[#allocation2 + $0x2c] sm:$0xf]
    %v66 = vld [vmem:[#allocation2 + $0x30] sm:$0xf]
    %v67 = vld [vmem:[#allocation2 + $0x34] sm:$0xf]
    %v68 = vld [vmem:[#allocation2 + $0x38] sm:$0xf]
    %v69 = vld [vmem:[#allocation2 + $0x3c] sm:$0xf]
    %v70 = vld [vmem:[#allocation2 + $0x40] sm:$0xf]
    %v71 = vld [vmem:[#allocation2 + $0x44] sm:$0xf]
    %v72 = vld [vmem:[#allocation2 + $0x48] sm:$0xf]
    %v73 = vld [vmem:[#allocation2 + $0x4c] sm:$0xf]
    %v74 = vld [vmem:[#allocation2 + $0x50] sm:$0xf]
    %v75 = vld [vmem:[#allocation2 + $0x54] sm:$0xf]
    %v76 = vld [vmem:[#allocation2 + $0x58] sm:$0xf]
    %v77 = vld [vmem:[#allocation2 + $0x5c] sm:$0xf]
    %v78 = vld [vmem:[#allocation2 + $0x60] sm:$0xf]
    %v79 = vld [vmem:[#allocation2 + $0x64] sm:$0xf]
    %v80 = vld [vmem:[#allocation2 + $0x68] sm:$0xf]
    %v81 = vld [vmem:[#allocation2 + $0x6c] sm:$0xf]
    %v82 = vld [vmem:[#allocation2 + $0x70] sm:$0xf]
    %v83 = vld [vmem:[#allocation2 + $0x74] sm:$0xf]
    %v84 = vld [vmem:[#allocation2 + $0x78] sm:$0xf]
    %v85 = vld [vmem:[#allocation2 + $0x7c] sm:$0xf]
    %v86 = vld [vmem:[#allocation2 + $0x80] sm:$0xf]
    %v87 = vld [vmem:[#allocation2 + $0x84] sm:$0xf]
    %v88 = vld [vmem:[#allocation2 + $0x88] sm:$0xf]
    %v89 = vld [vmem:[#allocation2 + $0x8c] sm:$0xf]
    %v90 = vld [vmem:[#allocation2 + $0x90] sm:$0xf]
    %v91 = vld [vmem:[#allocation2 + $0x94] sm:$0xf]
    %v92 = vld [vmem:[#allocation2 + $0x98] sm:$0xf]
    %v93 = vld [vmem:[#allocation2 + $0x9c] sm:$0xf]
    %v94 = vld [vmem:[#allocation2 + $0xa0] sm:$0xf]
    %v95 = vld [vmem:[#allocation2 + $0xa4] sm:$0xf]
    %v96 = vld [vmem:[#allocation2 + $0xa8] sm:$0xf]
    %v97 = vld [vmem:[#allocation2 + $0xac] sm:$0xf]
    %v98 = vld [vmem:[#allocation2 + $0xb0] sm:$0xf]
    %v99 = vld [vmem:[#allocation2 + $0xb4] sm:$0xf]
    %v100 = vld [vmem:[#allocation2 + $0xb8] sm:$0xf]
    %v101 = vld [vmem:[#allocation2 + $0xbc] sm:$0xf]
    %v102 = vld [vmem:[#allocation2 + $0xc0] sm:$0xf]
    %v103 = vld [vmem:[#allocation2 + $0xc4] sm:$0xf]
    %v104 = vld [vmem:[#allocation2 + $0xc8] sm:$0xf]
    %v105 = vld [vmem:[#allocation2 + $0xcc] sm:$0xf]
    %v106 = vld [vmem:[#allocation2 + $0xd0] sm:$0xf]
    %v107 = vld [vmem:[#allocation2 + $0xd4] sm:$0xf]
    %v108 = vld [vmem:[#allocation2 + $0xd8] sm:$0xf]
    %v109 = vld [vmem:[#allocation2 + $0xdc] sm:$0xf]
    %v110 = vld [vmem:[#allocation2 + $0xe0] sm:$0xf]
    %v111 = vld [vmem:[#allocation2 + $0xe4] sm:$0xf]
    %v112 = vld [vmem:[#allocation2 + $0xe8] sm:$0xf]
    %v113 = vld [vmem:[#allocation2 + $0xec] sm:$0xf]
    %v114 = vld [vmem:[#allocation2 + $0xf0] sm:$0xf]
    %v115 = vld [vmem:[#allocation2 + $0xf4] sm:$0xf]
    %v116 = vld [vmem:[#allocation2 + $0xf8] sm:$0xf]
    %v117 = vld [vmem:[#allocation2 + $0xfc] sm:$0xf]
    %v118 = vld [vmem:[#allocation2 + $0x100] sm:$0xf]
    %v119 = vld [vmem:[#allocation2 + $0x104] sm:$0xf]
    %v120 = vld [vmem:[#allocation2 + $0x108] sm:$0xf]
    %v121 = vld [vmem:[#allocation2 + $0x10c] sm:$0xf]
    %v122 = vld [vmem:[#allocation2 + $0x110] sm:$0xf]
    %v123 = vld [vmem:[#allocation2 + $0x114] sm:$0xf]
    %v124 = vld [vmem:[#allocation2 + $0x118] sm:$0xf]
    %v125 = vld [vmem:[#allocation2 + $0x11c] sm:$0xf]
    %v126 = vld [vmem:[#allocation2 + $0x120] sm:$0xf]
    %v127 = vld [vmem:[#allocation2 + $0x124] sm:$0xf]
    %v128 = vld [vmem:[#allocation2 + $0x128] sm:$0xf]
    %v129 = vld [vmem:[#allocation2 + $0x12c] sm:$0xf]
    %v130 = vld [vmem:[#allocation2 + $0x130] sm:$0xf]
    %v131 = vld [vmem:[#allocation2 + $0x134] sm:$0xf]
    %v132 = vld [vmem:[#allocation2 + $0x138] sm:$0xf]
    %v133 = vld [vmem:[#allocation2 + $0x13c] sm:$0xf]
    %v134 = vld [vmem:[#allocation2 + $0x140] sm:$0xf]
    %v135 = vld [vmem:[#allocation2 + $0x144] sm:$0xf]
    %v136 = vld [vmem:[#allocation2 + $0x148] sm:$0xf]
    %v137 = vld [vmem:[#allocation2 + $0x14c] sm:$0xf]
    %v138 = vld [vmem:[#allocation2 + $0x150] sm:$0xf]
    %v139 = vld [vmem:[#allocation2 + $0x154] sm:$0xf]
    %v140 = vld [vmem:[#allocation2 + $0x158] sm:$0xf]
    %v141 = vld [vmem:[#allocation2 + $0x15c] sm:$0xf]
    %v142 = vld [vmem:[#allocation2 + $0x160] sm:$0xf]
    %v143 = vld [vmem:[#allocation2 + $0x164] sm:$0xf]
    %v144 = vld [vmem:[#allocation2 + $0x168] sm:$0xf]
    %v145 = vld [vmem:[#allocation2 + $0x16c] sm:$0xf]
    %v146 = vld [vmem:[#allocation2 + $0x170] sm:$0xf]
    %v147 = vld [vmem:[#allocation2 + $0x174] sm:$0xf]
    %v148 = vld [vmem:[#allocation2 + $0x178] sm:$0xf]
    %v149 = vld [vmem:[#allocation2 + $0x17c] sm:$0xf]
    %v150 = vld [vmem:[#allocation2 + $0x180] sm:$0xf]
    %v151 = vld [vmem:[#allocation2 + $0x184] sm:$0xf]
    %v152 = vld [vmem:[#allocation2 + $0x188] sm:$0xf]
    %v153 = vld [vmem:[#allocation2 + $0x18c] sm:$0xf]
    %v154 = vld [vmem:[#allocation2 + $0x190] sm:$0xf]
    %v155 = vld [vmem:[#allocation2 + $0x194] sm:$0xf]
    %v156 = vld [vmem:[#allocation2 + $0x198] sm:$0xf]
    %v157 = vld [vmem:[#allocation2 + $0x19c] sm:$0xf]
    %v158 = vld [vmem:[#allocation2 + $0x1a0] sm:$0xf]
    %v159 = vld [vmem:[#allocation2 + $0x1a4] sm:$0xf]
    %v160 = vld [vmem:[#allocation2 + $0x1a8] sm:$0xf]
    %v161 = vld [vmem:[#allocation2 + $0x1ac] sm:$0xf]
    %v162 = vld [vmem:[#allocation2 + $0x1b0] sm:$0xf]
    %v163 = vld [vmem:[#allocation2 + $0x1b4] sm:$0xf]
    %v164 = vld [vmem:[#allocation2 + $0x1b8] sm:$0xf]
    %v165 = vld [vmem:[#allocation2 + $0x1bc] sm:$0xf]
    %v166 = vld [vmem:[#allocation2 + $0x1c0] sm:$0xf]
    %v167 = vld [vmem:[#allocation2 + $0x1c4] sm:$0xf]
    %v168 = vld [vmem:[#allocation2 + $0x1c8] sm:$0xf]
    %v169 = vld [vmem:[#allocation2 + $0x1cc] sm:$0xf]
    %v170 = vld [vmem:[#allocation2 + $0x1d0] sm:$0xf]
    %v171 = vld [vmem:[#allocation2 + $0x1d4] sm:$0xf]
    %v172 = vld [vmem:[#allocation2 + $0x1d8] sm:$0xf]
    %v173 = vld [vmem:[#allocation2 + $0x1dc] sm:$0xf]
    %v174 = vld [vmem:[#allocation2 + $0x1e0] sm:$0xf]
    %v175 = vld [vmem:[#allocation2 + $0x1e4] sm:$0xf]
    %v176 = vld [vmem:[#allocation2 + $0x1e8] sm:$0xf]
    %v177 = vld [vmem:[#allocation2 + $0x1ec] sm:$0xf]
    %v178 = vld [vmem:[#allocation2 + $0x1f0] sm:$0xf]
    %v179 = vld [vmem:[#allocation2 + $0x1f4] sm:$0xf]
    %v180 = vld [vmem:[#allocation2 + $0x1f8] sm:$0xf]
    %v181 = vld [vmem:[#allocation2 + $0x1fc] sm:$0xf]
    %v182 = vld [vmem:[%s3] sm:$0x1]
    %v184 = vlaneseq
    %v185 = vshrl.u32 %v184, 7
    %v186 = vsub.s32 0, %v185
    %v187 = vrot.slane %v182, %v186
    %v197 = vunpack.c.l.b16 %v46
    %v198 = vunpack.c.h.b16 %v46
    %v199 = vunpack.c.l.b16 %v47
    %v200 = vunpack.c.h.b16 %v47
    %v201 = vunpack.c.l.b16 %v48
    %v202 = vunpack.c.h.b16 %v48
    %v203 = vunpack.c.l.b16 %v49
    %v204 = vunpack.c.h.b16 %v49
    %v205 = vunpack.c.l.b16 %v50
    %v206 = vunpack.c.h.b16 %v50
    %v207 = vunpack.c.l.b16 %v51
    %v208 = vunpack.c.h.b16 %v51
    %v209 = vunpack.c.l.b16 %v52
    %v210 = vunpack.c.h.b16 %v52
    %v211 = vunpack.c.l.b16 %v53
    %v212 = vunpack.c.h.b16 %v53
    %v213 = vpack.c.b16 %v205, %v197
    %v214 = vpack.c.b16 %v206, %v198
    %v215 = vpack.c.b16 %v207, %v199
    %v216 = vpack.c.b16 %v208, %v200
    %v217 = vpack.c.b16 %v209, %v201
    %v218 = vpack.c.b16 %v210, %v202
    %v219 = vpack.c.b16 %v211, %v203
    %v220 = vpack.c.b16 %v212, %v204
    %v357 = vunpack.c.l.b16 %v54
    %v358 = vunpack.c.l.b16 %v55
    %v359 = vunpack.c.l.b16 %v56
    %v360 = vunpack.c.l.b16 %v57
    %v361 = vunpack.c.l.b16 %v58
    %v362 = vunpack.c.l.b16 %v59
    %v363 = vunpack.c.l.b16 %v60
    %v364 = vunpack.c.l.b16 %v61
    %v365 = vunpack.c.l.b16 %v62
    %v366 = vunpack.c.l.b16 %v63
    %v367 = vunpack.c.l.b16 %v64
    %v368 = vunpack.c.l.b16 %v65
    %v369 = vunpack.c.l.b16 %v66
    %v370 = vunpack.c.l.b16 %v67
    %v371 = vunpack.c.l.b16 %v68
    %v372 = vunpack.c.l.b16 %v69
    %v373 = vunpack.c.l.b16 %v70
    %v374 = vunpack.c.l.b16 %v71
    %v375 = vunpack.c.l.b16 %v72
    %v376 = vunpack.c.l.b16 %v73
    %v377 = vunpack.c.l.b16 %v74
    %v378 = vunpack.c.l.b16 %v75
    %v379 = vunpack.c.l.b16 %v76
    %v380 = vunpack.c.l.b16 %v77
    %v381 = vunpack.c.l.b16 %v78
    %v382 = vunpack.c.l.b16 %v79
    %v383 = vunpack.c.l.b16 %v80
    %v384 = vunpack.c.l.b16 %v81
    %v385 = vunpack.c.l.b16 %v82
    %v386 = vunpack.c.l.b16 %v83
    %v387 = vunpack.c.l.b16 %v84
    %v388 = vunpack.c.l.b16 %v85
    %v389 = vunpack.c.l.b16 %v86
    %v390 = vunpack.c.l.b16 %v87
    %v391 = vunpack.c.l.b16 %v88
    %v392 = vunpack.c.l.b16 %v89
    %v393 = vunpack.c.l.b16 %v90
    %v394 = vunpack.c.l.b16 %v91
    %v395 = vunpack.c.l.b16 %v92
    %v396 = vunpack.c.l.b16 %v93
    %v397 = vunpack.c.l.b16 %v94
    %v398 = vunpack.c.l.b16 %v95
    %v399 = vunpack.c.l.b16 %v96
    %v400 = vunpack.c.l.b16 %v97
    %v401 = vunpack.c.l.b16 %v98
    %v402 = vunpack.c.l.b16 %v99
    %v403 = vunpack.c.l.b16 %v100
    %v404 = vunpack.c.l.b16 %v101
    %v405 = vunpack.c.l.b16 %v102
    %v406 = vunpack.c.l.b16 %v103
    %v407 = vunpack.c.l.b16 %v104
    %v408 = vunpack.c.l.b16 %v105
    %v409 = vunpack.c.l.b16 %v106
    %v410 = vunpack.c.l.b16 %v107
    %v411 = vunpack.c.l.b16 %v108
    %v412 = vunpack.c.l.b16 %v109
    %v413 = vunpack.c.l.b16 %v110
    %v414 = vunpack.c.l.b16 %v111
    %v415 = vunpack.c.l.b16 %v112
    %v416 = vunpack.c.l.b16 %v113
    %v417 = vunpack.c.l.b16 %v114
    %v418 = vunpack.c.l.b16 %v115
    %v419 = vunpack.c.l.b16 %v116
    %v420 = vunpack.c.l.b16 %v117
    %v421 = vunpack.c.l.b16 %v118
    %v422 = vunpack.c.l.b16 %v119
    %v423 = vunpack.c.l.b16 %v120
    %v424 = vunpack.c.l.b16 %v121
    %v425 = vunpack.c.l.b16 %v122
    %v426 = vunpack.c.l.b16 %v123
    %v427 = vunpack.c.l.b16 %v124
    %v428 = vunpack.c.l.b16 %v125
    %v429 = vunpack.c.l.b16 %v126
    %v430 = vunpack.c.l.b16 %v127
    %v431 = vunpack.c.l.b16 %v128
    %v432 = vunpack.c.l.b16 %v129
    %v433 = vunpack.c.l.b16 %v130
    %v434 = vunpack.c.l.b16 %v131
    %v435 = vunpack.c.l.b16 %v132
    %v436 = vunpack.c.l.b16 %v133
    %v437 = vunpack.c.l.b16 %v134
    %v438 = vunpack.c.l.b16 %v135
    %v439 = vunpack.c.l.b16 %v136
    %v440 = vunpack.c.l.b16 %v137
    %v441 = vunpack.c.l.b16 %v138
    %v442 = vunpack.c.l.b16 %v139
    %v443 = vunpack.c.l.b16 %v140
    %v444 = vunpack.c.l.b16 %v141
    %v445 = vunpack.c.l.b16 %v142
    %v446 = vunpack.c.l.b16 %v143
    %v447 = vunpack.c.l.b16 %v144
    %v448 = vunpack.c.l.b16 %v145
    %v449 = vunpack.c.l.b16 %v146
    %v450 = vunpack.c.l.b16 %v147
    %v451 = vunpack.c.l.b16 %v148
    %v452 = vunpack.c.l.b16 %v149
    %v453 = vunpack.c.l.b16 %v150
    %v454 = vunpack.c.l.b16 %v151
    %v455 = vunpack.c.l.b16 %v152
    %v456 = vunpack.c.l.b16 %v153
    %v457 = vunpack.c.l.b16 %v154
    %v458 = vunpack.c.l.b16 %v155
    %v459 = vunpack.c.l.b16 %v156
    %v460 = vunpack.c.l.b16 %v157
    %v461 = vunpack.c.l.b16 %v158
    %v462 = vunpack.c.l.b16 %v159
    %v463 = vunpack.c.l.b16 %v160
    %v464 = vunpack.c.l.b16 %v161
    %v465 = vunpack.c.l.b16 %v162
    %v466 = vunpack.c.l.b16 %v163
    %v467 = vunpack.c.l.b16 %v164
    %v468 = vunpack.c.l.b16 %v165
    %v469 = vunpack.c.l.b16 %v166
    %v470 = vunpack.c.l.b16 %v167
    %v471 = vunpack.c.l.b16 %v168
    %v472 = vunpack.c.l.b16 %v169
    %v473 = vunpack.c.l.b16 %v170
    %v474 = vunpack.c.l.b16 %v171
    %v475 = vunpack.c.l.b16 %v172
    %v476 = vunpack.c.l.b16 %v173
    %v477 = vunpack.c.l.b16 %v174
    %v478 = vunpack.c.l.b16 %v175
    %v479 = vunpack.c.l.b16 %v176
    %v480 = vunpack.c.l.b16 %v177
    %v481 = vunpack.c.l.b16 %v178
    %v482 = vunpack.c.l.b16 %v179
    %v483 = vunpack.c.l.b16 %v180
    %v484 = vunpack.c.l.b16 %v181
    %v485 = vpack.c.b16 %v358, %v357
    %v486 = vpack.c.b16 %v360, %v359
    %v487 = vpack.c.b16 %v362, %v361
    %v488 = vpack.c.b16 %v364, %v363
    %v489 = vpack.c.b16 %v366, %v365
    %v490 = vpack.c.b16 %v368, %v367
    %v491 = vpack.c.b16 %v370, %v369
    %v492 = vpack.c.b16 %v372, %v371
    %v493 = vpack.c.b16 %v374, %v373
    %v494 = vpack.c.b16 %v376, %v375
    %v495 = vpack.c.b16 %v378, %v377
    %v496 = vpack.c.b16 %v380, %v379
    %v497 = vpack.c.b16 %v382, %v381
    %v498 = vpack.c.b16 %v384, %v383
    %v499 = vpack.c.b16 %v386, %v385
    %v500 = vpack.c.b16 %v388, %v387
    %v501 = vpack.c.b16 %v390, %v389
    %v502 = vpack.c.b16 %v392, %v391
    %v503 = vpack.c.b16 %v394, %v393
    %v504 = vpack.c.b16 %v396, %v395
    %v505 = vpack.c.b16 %v398, %v397
    %v506 = vpack.c.b16 %v400, %v399
    %v507 = vpack.c.b16 %v402, %v401
    %v508 = vpack.c.b16 %v404, %v403
    %v509 = vpack.c.b16 %v406, %v405
    %v510 = vpack.c.b16 %v408, %v407
    %v511 = vpack.c.b16 %v410, %v409
    %v512 = vpack.c.b16 %v412, %v411
    %v513 = vpack.c.b16 %v414, %v413
    %v514 = vpack.c.b16 %v416, %v415
    %v515 = vpack.c.b16 %v418, %v417
    %v516 = vpack.c.b16 %v420, %v419
    %v517 = vpack.c.b16 %v422, %v421
    %v518 = vpack.c.b16 %v424, %v423
    %v519 = vpack.c.b16 %v426, %v425
    %v520 = vpack.c.b16 %v428, %v427
    %v521 = vpack.c.b16 %v430, %v429
    %v522 = vpack.c.b16 %v432, %v431
    %v523 = vpack.c.b16 %v434, %v433
    %v524 = vpack.c.b16 %v436, %v435
    %v525 = vpack.c.b16 %v438, %v437
    %v526 = vpack.c.b16 %v440, %v439
    %v527 = vpack.c.b16 %v442, %v441
    %v528 = vpack.c.b16 %v444, %v443
    %v529 = vpack.c.b16 %v446, %v445
    %v530 = vpack.c.b16 %v448, %v447
    %v531 = vpack.c.b16 %v450, %v449
    %v532 = vpack.c.b16 %v452, %v451
    %v533 = vpack.c.b16 %v454, %v453
    %v534 = vpack.c.b16 %v456, %v455
    %v535 = vpack.c.b16 %v458, %v457
    %v536 = vpack.c.b16 %v460, %v459
    %v537 = vpack.c.b16 %v462, %v461
    %v538 = vpack.c.b16 %v464, %v463
    %v539 = vpack.c.b16 %v466, %v465
    %v540 = vpack.c.b16 %v468, %v467
    %v541 = vpack.c.b16 %v470, %v469
    %v542 = vpack.c.b16 %v472, %v471
    %v543 = vpack.c.b16 %v474, %v473
    %v544 = vpack.c.b16 %v476, %v475
    %v545 = vpack.c.b16 %v478, %v477
    %v546 = vpack.c.b16 %v480, %v479
    %v547 = vpack.c.b16 %v482, %v481
    %v548 = vpack.c.b16 %v484, %v483
    %613 = vmatprep.subr.bf16.mxu0 0
    %614 = vmatpush1.bf16.msra.mxu0 %v492
    %615 = vmatprep.subr.bf16.mxu0 0
    %616 = vmatpush1.bf16.msra.mxu0 %v491
    %617 = vmatprep.subr.bf16.mxu0 0
    %618 = vmatpush1.bf16.msra.mxu0 %v490
    %619 = vmatprep.subr.bf16.mxu0 0
    %620 = vmatpush1.bf16.msra.mxu0 %v489
    %621 = vmatprep.subr.bf16.mxu0 0
    %622 = vmatpush1.bf16.msra.mxu0 %v488
    %623 = vmatprep.subr.bf16.mxu0 0
    %624 = vmatpush1.bf16.msra.mxu0 %v487
    %625 = vmatprep.subr.bf16.mxu0 0
    %626 = vmatpush1.bf16.msra.mxu0 %v486
    %627 = vmatprep.subr.bf16.mxu0 0
    %628 = vmatpush1.bf16.msra.mxu0 %v485
    %629 = vmatprep.subr.bf16.mxu0 0
    %630 = vmatpush2.bf16.msra.mxu0 %v500
    %631 = vmatprep.subr.bf16.mxu0 0
    %632 = vmatpush2.bf16.msra.mxu0 %v499
    %633 = vmatprep.subr.bf16.mxu0 0
    %634 = vmatpush2.bf16.msra.mxu0 %v498
    %635 = vmatprep.subr.bf16.mxu0 0
    %636 = vmatpush2.bf16.msra.mxu0 %v497
    %637 = vmatprep.subr.bf16.mxu0 0
    %638 = vmatpush2.bf16.msra.mxu0 %v496
    %639 = vmatprep.subr.bf16.mxu0 0
    %640 = vmatpush2.bf16.msra.mxu0 %v495
    %641 = vmatprep.subr.bf16.mxu0 0
    %642 = vmatpush2.bf16.msra.mxu0 %v494
    %643 = vmatprep.subr.bf16.mxu0 0
    %644 = vmatpush2.bf16.msra.mxu0 %v493
    %645 = vmatprep.mubr.bf16.mxu0 %v214
    %646 = vmatmul.mubr.bf16.gmra.mxu0 %v213
    %v647 = vpop.f32.mrf.mxu0
    %v648 = vadd.f32 %v187, %v647
    %v649 = vpop.f32.mrf.mxu0
    %v650 = vpop.f32.mrf.mxu0
    %v651 = vadd.f32 %v187, %v650
    %v652 = vpop.f32.mrf.mxu0
    %653 = vdwg.mxu0
    %654 = vmatprep.subr.bf16.mxu0 0
    %655 = vmatpush1.bf16.msra.mxu0 %v508
    %656 = vmatprep.subr.bf16.mxu0 0
    %657 = vmatpush1.bf16.msra.mxu0 %v507
    %658 = vmatprep.subr.bf16.mxu0 0
    %659 = vmatpush1.bf16.msra.mxu0 %v506
    %660 = vmatprep.subr.bf16.mxu0 0
    %661 = vmatpush1.bf16.msra.mxu0 %v505
    %662 = vmatprep.subr.bf16.mxu0 0
    %663 = vmatpush1.bf16.msra.mxu0 %v504
    %664 = vmatprep.subr.bf16.mxu0 0
    %665 = vmatpush1.bf16.msra.mxu0 %v503
    %666 = vmatprep.subr.bf16.mxu0 0
    %667 = vmatpush1.bf16.msra.mxu0 %v502
    %668 = vmatprep.subr.bf16.mxu0 0
    %669 = vmatpush1.bf16.msra.mxu0 %v501
    %670 = vmatprep.subr.bf16.mxu0 0
    %671 = vmatpush2.bf16.msra.mxu0 %v516
    %672 = vmatprep.subr.bf16.mxu0 0
    %673 = vmatpush2.bf16.msra.mxu0 %v515
    %674 = vmatprep.subr.bf16.mxu0 0
    %675 = vmatpush2.bf16.msra.mxu0 %v514
    %676 = vmatprep.subr.bf16.mxu0 0
    %677 = vmatpush2.bf16.msra.mxu0 %v513
    %678 = vmatprep.subr.bf16.mxu0 0
    %679 = vmatpush2.bf16.msra.mxu0 %v512
    %680 = vmatprep.subr.bf16.mxu0 0
    %681 = vmatpush2.bf16.msra.mxu0 %v511
    %682 = vmatprep.subr.bf16.mxu0 0
    %683 = vmatpush2.bf16.msra.mxu0 %v510
    %684 = vmatprep.subr.bf16.mxu0 0
    %685 = vmatpush2.bf16.msra.mxu0 %v509
    %686 = vmatprep.mubr.bf16.mxu0 %v216
    %687 = vmatmul.mubr.bf16.gmra.mxu0 %v215
    %v688 = vpop.f32.mrf.mxu0
    %v689 = vadd.f32 %v648, %v688
    %v690 = vpop.f32.mrf.mxu0
    %v691 = vpop.f32.mrf.mxu0
    %v692 = vadd.f32 %v651, %v691
    %v693 = vpop.f32.mrf.mxu0
    %694 = vdwg.mxu0
    %695 = vmatprep.subr.bf16.mxu0 0
    %696 = vmatpush1.bf16.msra.mxu0 %v524
    %697 = vmatprep.subr.bf16.mxu0 0
    %698 = vmatpush1.bf16.msra.mxu0 %v523
    %699 = vmatprep.subr.bf16.mxu0 0
    %700 = vmatpush1.bf16.msra.mxu0 %v522
    %701 = vmatprep.subr.bf16.mxu0 0
    %702 = vmatpush1.bf16.msra.mxu0 %v521
    %703 = vmatprep.subr.bf16.mxu0 0
    %704 = vmatpush1.bf16.msra.mxu0 %v520
    %705 = vmatprep.subr.bf16.mxu0 0
    %706 = vmatpush1.bf16.msra.mxu0 %v519
    %707 = vmatprep.subr.bf16.mxu0 0
    %708 = vmatpush1.bf16.msra.mxu0 %v518
    %709 = vmatprep.subr.bf16.mxu0 0
    %710 = vmatpush1.bf16.msra.mxu0 %v517
    %711 = vmatprep.subr.bf16.mxu0 0
    %712 = vmatpush2.bf16.msra.mxu0 %v532
    %713 = vmatprep.subr.bf16.mxu0 0
    %714 = vmatpush2.bf16.msra.mxu0 %v531
    %715 = vmatprep.subr.bf16.mxu0 0
    %716 = vmatpush2.bf16.msra.mxu0 %v530
    %717 = vmatprep.subr.bf16.mxu0 0
    %718 = vmatpush2.bf16.msra.mxu0 %v529
    %719 = vmatprep.subr.bf16.mxu0 0
    %720 = vmatpush2.bf16.msra.mxu0 %v528
    %721 = vmatprep.subr.bf16.mxu0 0
    %722 = vmatpush2.bf16.msra.mxu0 %v527
    %723 = vmatprep.subr.bf16.mxu0 0
    %724 = vmatpush2.bf16.msra.mxu0 %v526
    %725 = vmatprep.subr.bf16.mxu0 0
    %726 = vmatpush2.bf16.msra.mxu0 %v525
    %727 = vmatprep.mubr.bf16.mxu0 %v218
    %728 = vmatmul.mubr.bf16.gmra.mxu0 %v217
    %v729 = vpop.f32.mrf.mxu0
    %v730 = vadd.f32 %v689, %v729
    %v731 = vpop.f32.mrf.mxu0
    %v732 = vpop.f32.mrf.mxu0
    %v733 = vadd.f32 %v692, %v732
    %v734 = vpop.f32.mrf.mxu0
    %735 = vdwg.mxu0
    %736 = vmatprep.subr.bf16.mxu0 0
    %737 = vmatpush1.bf16.msra.mxu0 %v540
    %738 = vmatprep.subr.bf16.mxu0 0
    %739 = vmatpush1.bf16.msra.mxu0 %v539
    %740 = vmatprep.subr.bf16.mxu0 0
    %741 = vmatpush1.bf16.msra.mxu0 %v538
    %742 = vmatprep.subr.bf16.mxu0 0
    %743 = vmatpush1.bf16.msra.mxu0 %v537
    %744 = vmatprep.subr.bf16.mxu0 0
    %745 = vmatpush1.bf16.msra.mxu0 %v536
    %746 = vmatprep.subr.bf16.mxu0 0
    %747 = vmatpush1.bf16.msra.mxu0 %v535
    %748 = vmatprep.subr.bf16.mxu0 0
    %749 = vmatpush1.bf16.msra.mxu0 %v534
    %750 = vmatprep.subr.bf16.mxu0 0
    %751 = vmatpush1.bf16.msra.mxu0 %v533
    %752 = vmatprep.subr.bf16.mxu0 0
    %753 = vmatpush2.bf16.msra.mxu0 %v548
    %754 = vmatprep.subr.bf16.mxu0 0
    %755 = vmatpush2.bf16.msra.mxu0 %v547
    %756 = vmatprep.subr.bf16.mxu0 0
    %757 = vmatpush2.bf16.msra.mxu0 %v546
    %758 = vmatprep.subr.bf16.mxu0 0
    %759 = vmatpush2.bf16.msra.mxu0 %v545
    %760 = vmatprep.subr.bf16.mxu0 0
    %761 = vmatpush2.bf16.msra.mxu0 %v544
    %762 = vmatprep.subr.bf16.mxu0 0
    %763 = vmatpush2.bf16.msra.mxu0 %v543
    %764 = vmatprep.subr.bf16.mxu0 0
    %765 = vmatpush2.bf16.msra.mxu0 %v542
    %766 = vmatprep.subr.bf16.mxu0 0
    %767 = vmatpush2.bf16.msra.mxu0 %v541
    %768 = vmatprep.mubr.bf16.mxu0 %v220
    %769 = vmatmul.mubr.bf16.gmra.mxu0 %v219
    %v770 = vpop.f32.mrf.mxu0
    %v771 = vadd.f32 %v730, %v770
    %v772 = vpop.f32.mrf.mxu0
    %v773 = vpop.f32.mrf.mxu0
    %v774 = vadd.f32 %v733, %v773
    %v775 = vpop.f32.mrf.mxu0
    %776 = vdwg.mxu0
    %v777 = vld [vmem:[%s2] sm:$0xf]
    %v778 = vld [vmem:[%s2 + $0x4] sm:$0xf]
    %v779 = vld [vmem:[%s2 + $0x8] sm:$0xf]
    %v780 = vld [vmem:[%s2 + $0xc] sm:$0xf]
    %v781 = vld [vmem:[%s4] sm:$0xf]
    %v782 = vld [vmem:[%s4 + $0x4] sm:$0xf]
    %v783 = vld [vmem:[%s4 + $0x8] sm:$0xf]
    %v784 = vld [vmem:[%s4 + $0xc] sm:$0xf]
    %v785 = vld [vmem:[%s5] sm:$0xf]
    %v786 = vld [vmem:[%s5 + $0x4] sm:$0xf]
    %v787 = vld [vmem:[%s5 + $0x8] sm:$0xf]
    %v788 = vld [vmem:[%s5 + $0xc] sm:$0xf]
    %v789 = vld [vmem:[%s6] sm:$0x1]
    %v791 = vlaneseq
    %v792 = vshrl.u32 %v791, 7
    %v793 = vsub.s32 0, %v792
    %v794 = vrot.slane %v789, %v793
    %v800 = vunpack.c.l.b16 %v777
    %v801 = vunpack.c.l.b16 %v778
    %v802 = vunpack.c.l.b16 %v779
    %v803 = vunpack.c.l.b16 %v780
    %v804 = vpack.c.b16 %v801, %v800
    %v805 = vpack.c.b16 %v803, %v802
    %vm808 = vcmask 261120
    %v810 = vsel %vm808, 0, 0
    %812 = vmatprep.subr.bf16.mxu0 0
    %813 = vmatpush1.bf16.msra.mxu0 0
    %814 = vmatprep.subr.bf16.mxu0 0
    %815 = vmatpush1.bf16.msra.mxu0 0
    %816 = vmatprep.subr.bf16.mxu0 0
    %817 = vmatpush1.bf16.msra.mxu0 0
    %818 = vmatprep.subr.bf16.mxu0 0
    %819 = vmatpush1.bf16.msra.mxu0 0
    %820 = vmatprep.subr.bf16.mxu0 0
    %821 = vmatpush1.bf16.msra.mxu0 0
    %822 = vmatprep.subr.bf16.mxu0 0
    %823 = vmatpush1.bf16.msra.mxu0 0
    %824 = vmatprep.subr.bf16.mxu0 0
    %825 = vmatpush1.bf16.msra.mxu0 %v805
    %826 = vmatprep.subr.bf16.mxu0 0
    %827 = vmatpush1.bf16.msra.mxu0 %v804
    %828 = vmatprep.subr.bf16.mxu0 0
    %829 = vmatpush2.bf16.msra.mxu0 0
    %830 = vmatprep.subr.bf16.mxu0 0
    %831 = vmatpush2.bf16.msra.mxu0 0
    %832 = vmatprep.subr.bf16.mxu0 0
    %833 = vmatpush2.bf16.msra.mxu0 0
    %834 = vmatprep.subr.bf16.mxu0 0
    %835 = vmatpush2.bf16.msra.mxu0 0
    %836 = vmatprep.subr.bf16.mxu0 0
    %837 = vmatpush2.bf16.msra.mxu0 0
    %838 = vmatprep.subr.bf16.mxu0 0
    %839 = vmatpush2.bf16.msra.mxu0 0
    %840 = vmatprep.subr.bf16.mxu0 0
    %841 = vmatpush2.bf16.msra.mxu0 0
    %842 = vmatprep.subr.bf16.mxu0 0
    %843 = vmatpush2.bf16.msra.mxu0 0
    %844 = vmatprep.mubr.bf16.mxu0 0
    %845 = vmatmul.mubr.bf16.gmra.mxu0 %v810
    %v846 = vpop.f32.mrf.mxu0
    %v847 = vadd.f32 0.0, %v846
    %v848 = vpop.f32.mrf.mxu0
    %v849 = vpop.f32.mrf.mxu0
    %v850 = vpop.f32.mrf.mxu0
    %851 = vdwg.mxu0
    %v852 = vadd.f32 %v771, %v847
    %v853 = vxor.u32 %v852, 2147483648
    %v854 = vmul.f32 %v853, 1.442695
    %v855 = vpow.pop %v854
    %v856 = vadd.f32 %v855, 1.0
    %v857 = vrcp.pop %v856
    %v858 = vmul.f32 1.0, %v857
    %v859 = vtanh.pop %v852
    %v860 = vmul.f32 %v858, 0.0
    %862 = vrot.lane.b32.xlu0 %v859, 64
    %v863 = vpop.permute.xlu0 %862
    %v865 = vmul.f32 %v858, %v863
    %867 = vrot.lane.b32.xlu0 %v865, 32
    %v868 = vpop.permute.xlu0 %867
    %v870 = vadd.f32 %v860, %v868
    %v871 = vtanh.pop %v870
    %873 = vrot.lane.b32.xlu0 %v871, 64
    %v874 = vpop.permute.xlu0 %873
    %v876 = vmul.f32 %v858, %v874
    %v877 = vpack.c.bf16 %v876, %v876
    %v882 = vunpack.c.l.b16 %v785
    %v883 = vunpack.c.l.b16 %v786
    %v884 = vunpack.c.l.b16 %v787
    %v885 = vunpack.c.l.b16 %v788
    %v886 = vpack.c.b16 %v883, %v882
    %v887 = vpack.c.b16 %v885, %v884
    %890 = vmatprep.subr.bf16.mxu0 0
    %891 = vmatpush1.bf16.msra.mxu0 0
    %892 = vmatprep.subr.bf16.mxu0 0
    %893 = vmatpush1.bf16.msra.mxu0 0
    %894 = vmatprep.subr.bf16.mxu0 0
    %895 = vmatpush1.bf16.msra.mxu0 0
    %896 = vmatprep.subr.bf16.mxu0 0
    %897 = vmatpush1.bf16.msra.mxu0 0
    %898 = vmatprep.subr.bf16.mxu0 0
    %899 = vmatpush1.bf16.msra.mxu0 0
    %900 = vmatprep.subr.bf16.mxu0 0
    %901 = vmatpush1.bf16.msra.mxu0 0
    %902 = vmatprep.subr.bf16.mxu0 0
    %903 = vmatpush1.bf16.msra.mxu0 %v887
    %904 = vmatprep.subr.bf16.mxu0 0
    %905 = vmatpush1.bf16.msra.mxu0 %v886
    %906 = vmatprep.subr.bf16.mxu0 0
    %907 = vmatpush2.bf16.msra.mxu0 0
    %908 = vmatprep.subr.bf16.mxu0 0
    %909 = vmatpush2.bf16.msra.mxu0 0
    %910 = vmatprep.subr.bf16.mxu0 0
    %911 = vmatpush2.bf16.msra.mxu0 0
    %912 = vmatprep.subr.bf16.mxu0 0
    %913 = vmatpush2.bf16.msra.mxu0 0
    %914 = vmatprep.subr.bf16.mxu0 0
    %915 = vmatpush2.bf16.msra.mxu0 0
    %916 = vmatprep.subr.bf16.mxu0 0
    %917 = vmatpush2.bf16.msra.mxu0 0
    %918 = vmatprep.subr.bf16.mxu0 0
    %919 = vmatpush2.bf16.msra.mxu0 0
    %920 = vmatprep.subr.bf16.mxu0 0
    %921 = vmatpush2.bf16.msra.mxu0 0
    %922 = vmatprep.mubr.bf16.mxu0 0
    %923 = vmatmul.mubr.bf16.gmra.mxu0 %v810
    %v924 = vpop.f32.mrf.mxu0
    %v925 = vadd.f32 0.0, %v924
    %v926 = vpop.f32.mrf.mxu0
    %v927 = vpop.f32.mrf.mxu0
    %v928 = vpop.f32.mrf.mxu0
    %929 = vdwg.mxu0
    %931 = vrot.lane.b32.xlu0 %v877, 32
    %v932 = vpop.permute.xlu0 %931
    %v937 = vunpack.c.l.b16 %v781
    %v938 = vunpack.c.l.b16 %v782
    %v939 = vunpack.c.l.b16 %v783
    %v940 = vunpack.c.l.b16 %v784
    %v941 = vpack.c.b16 %v938, %v937
    %v942 = vpack.c.b16 %v940, %v939
    %v946 = vsel %vm808, %v932, 0
    %948 = vmatprep.subr.bf16.mxu0 0
    %949 = vmatpush1.bf16.msra.mxu0 0
    %950 = vmatprep.subr.bf16.mxu0 0
    %951 = vmatpush1.bf16.msra.mxu0 0
    %952 = vmatprep.subr.bf16.mxu0 0
    %953 = vmatpush1.bf16.msra.mxu0 0
    %954 = vmatprep.subr.bf16.mxu0 0
    %955 = vmatpush1.bf16.msra.mxu0 0
    %956 = vmatprep.subr.bf16.mxu0 0
    %957 = vmatpush1.bf16.msra.mxu0 0
    %958 = vmatprep.subr.bf16.mxu0 0
    %959 = vmatpush1.bf16.msra.mxu0 0
    %960 = vmatprep.subr.bf16.mxu0 0
    %961 = vmatpush1.bf16.msra.mxu0 %v942
    %962 = vmatprep.subr.bf16.mxu0 0
    %963 = vmatpush1.bf16.msra.mxu0 %v941
    %964 = vmatprep.subr.bf16.mxu0 0
    %965 = vmatpush2.bf16.msra.mxu0 0
    %966 = vmatprep.subr.bf16.mxu0 0
    %967 = vmatpush2.bf16.msra.mxu0 0
    %968 = vmatprep.subr.bf16.mxu0 0
    %969 = vmatpush2.bf16.msra.mxu0 0
    %970 = vmatprep.subr.bf16.mxu0 0
    %971 = vmatpush2.bf16.msra.mxu0 0
    %972 = vmatprep.subr.bf16.mxu0 0
    %973 = vmatpush2.bf16.msra.mxu0 0
    %974 = vmatprep.subr.bf16.mxu0 0
    %975 = vmatpush2.bf16.msra.mxu0 0
    %976 = vmatprep.subr.bf16.mxu0 0
    %977 = vmatpush2.bf16.msra.mxu0 0
    %978 = vmatprep.subr.bf16.mxu0 0
    %979 = vmatpush2.bf16.msra.mxu0 0
    %980 = vmatprep.mubr.bf16.mxu0 0
    %981 = vmatmul.mubr.bf16.gmra.mxu0 %v946
    %v982 = vpop.f32.mrf.mxu0
    %v983 = vadd.f32 %v925, %v982
    %v984 = vpop.f32.mrf.mxu0
    %v985 = vpop.f32.mrf.mxu0
    %v986 = vpop.f32.mrf.mxu0
    %987 = vdwg.mxu0
    %v988 = vadd.f32 %v983, %v794
    %v989 = vxor.u32 %v988, 2147483648
    %v990 = vmul.f32 %v989, 1.442695
    %v991 = vpow.pop %v990
    %v992 = vadd.f32 %v991, 1.0
    %v993 = vrcp.pop %v992
    %v994 = vmul.f32 1.0, %v993
    %v995 = vtanh.pop %v988
    %v996 = vmul.f32 %v994, 0.0
    %998 = vrot.lane.b32.xlu0 %v995, 64
    %v999 = vpop.permute.xlu0 %998
    %v1001 = vmul.f32 %v994, %v999
    %1003 = vrot.lane.b32.xlu0 %v1001, 32
    %v1004 = vpop.permute.xlu0 %1003
    %v1006 = vadd.f32 %v996, %v1004
    %v1007 = vtanh.pop %v1006
    %1009 = vrot.lane.b32.xlu0 %v1007, 64
    %v1010 = vpop.permute.xlu0 %1009
    %v1012 = vmul.f32 %v994, %v1010
    %v1013 = vpack.c.bf16 %v1012, %v1012
    %1015 = vrot.lane.b32.xlu0 %v1012, 32
    %v1016 = vpop.permute.xlu0 %1015
    %vm1018 = vcmask 254976
    %1019 = vst.msk [vmem:[#allocation5] sm:$0x3] %vm1018, %v1016
    %1020 = vmatprep.subr.bf16.mxu0 0
    %1021 = vmatpush1.bf16.msra.mxu0 0
    %1022 = vmatprep.subr.bf16.mxu0 0
    %1023 = vmatpush1.bf16.msra.mxu0 0
    %1024 = vmatprep.subr.bf16.mxu0 0
    %1025 = vmatpush1.bf16.msra.mxu0 0
    %1026 = vmatprep.subr.bf16.mxu0 0
    %1027 = vmatpush1.bf16.msra.mxu0 0
    %1028 = vmatprep.subr.bf16.mxu0 0
    %1029 = vmatpush1.bf16.msra.mxu0 0
    %1030 = vmatprep.subr.bf16.mxu0 0
    %1031 = vmatpush1.bf16.msra.mxu0 0
    %1032 = vmatprep.subr.bf16.mxu0 0
    %1033 = vmatpush1.bf16.msra.mxu0 %v805
    %1034 = vmatprep.subr.bf16.mxu0 0
    %1035 = vmatpush1.bf16.msra.mxu0 %v804
    %1036 = vmatprep.subr.bf16.mxu0 0
    %1037 = vmatpush2.bf16.msra.mxu0 0
    %1038 = vmatprep.subr.bf16.mxu0 0
    %1039 = vmatpush2.bf16.msra.mxu0 0
    %1040 = vmatprep.subr.bf16.mxu0 0
    %1041 = vmatpush2.bf16.msra.mxu0 0
    %1042 = vmatprep.subr.bf16.mxu0 0
    %1043 = vmatpush2.bf16.msra.mxu0 0
    %1044 = vmatprep.subr.bf16.mxu0 0
    %1045 = vmatpush2.bf16.msra.mxu0 0
    %1046 = vmatprep.subr.bf16.mxu0 0
    %1047 = vmatpush2.bf16.msra.mxu0 0
    %1048 = vmatprep.subr.bf16.mxu0 0
    %1049 = vmatpush2.bf16.msra.mxu0 0
    %1050 = vmatprep.subr.bf16.mxu0 0
    %1051 = vmatpush2.bf16.msra.mxu0 0
    %1052 = vmatprep.mubr.bf16.mxu0 0
    %1053 = vmatmul.mubr.bf16.gmra.mxu0 %v946
    %v1054 = vpop.f32.mrf.mxu0
    %v1055 = vadd.f32 0.0, %v1054
    %v1056 = vpop.f32.mrf.mxu0
    %v1057 = vpop.f32.mrf.mxu0
    %v1058 = vpop.f32.mrf.mxu0
    %1059 = vdwg.mxu0
    %v1061 = vrot.slane %v1055, 6
    %v1063 = vadd.f32 %v771, %v1061
    %v1064 = vxor.u32 %v1063, 2147483648
    %v1065 = vmul.f32 %v1064, 1.442695
    %v1066 = vpow.pop %v1065
    %v1067 = vadd.f32 %v1066, 1.0
    %v1068 = vrcp.pop %v1067
    %v1069 = vmul.f32 1.0, %v1068
    %v1070 = vtanh.pop %v1063
    %v1072 = vrot.slane %v870, 6
    %v1074 = vmul.f32 %v1069, %v1072
    %1076 = vrot.lane.b32.xlu0 %v1070, 64
    %v1077 = vpop.permute.xlu0 %1076
    %v1079 = vmul.f32 %v1069, %v1077
    %1081 = vrot.lane.b32.xlu0 %v1079, 32
    %v1082 = vpop.permute.xlu0 %1081
    %v1084 = vadd.f32 %v1074, %v1082
    %v1085 = vtanh.pop %v1084
    %1087 = vrot.lane.b32.xlu0 %v1085, 64
    %v1088 = vpop.permute.xlu0 %1087
    %v1090 = vmul.f32 %v1069, %v1088
    %v1091 = vpack.c.bf16 %v1090, %v1090
    %1093 = vrot.lane.b32.xlu0 %v1013, 32
    %v1094 = vpop.permute.xlu0 %1093
    %v1096 = vsel %vm808, %v1094, 0
    %1098 = vmatprep.subr.bf16.mxu0 0
    %1099 = vmatpush1.bf16.msra.mxu0 0
    %1100 = vmatprep.subr.bf16.mxu0 0
    %1101 = vmatpush1.bf16.msra.mxu0 0
    %1102 = vmatprep.subr.bf16.mxu0 0
    %1103 = vmatpush1.bf16.msra.mxu0 0
    %1104 = vmatprep.subr.bf16.mxu0 0
    %1105 = vmatpush1.bf16.msra.mxu0 0
    %1106 = vmatprep.subr.bf16.mxu0 0
    %1107 = vmatpush1.bf16.msra.mxu0 0
    %1108 = vmatprep.subr.bf16.mxu0 0
    %1109 = vmatpush1.bf16.msra.mxu0 0
    %1110 = vmatprep.subr.bf16.mxu0 0
    %1111 = vmatpush1.bf16.msra.mxu0 %v887
    %1112 = vmatprep.subr.bf16.mxu0 0
    %1113 = vmatpush1.bf16.msra.mxu0 %v886
    %1114 = vmatprep.subr.bf16.mxu0 0
    %1115 = vmatpush2.bf16.msra.mxu0 0
    %1116 = vmatprep.subr.bf16.mxu0 0
    %1117 = vmatpush2.bf16.msra.mxu0 0
    %1118 = vmatprep.subr.bf16.mxu0 0
    %1119 = vmatpush2.bf16.msra.mxu0 0
    %1120 = vmatprep.subr.bf16.mxu0 0
    %1121 = vmatpush2.bf16.msra.mxu0 0
    %1122 = vmatprep.subr.bf16.mxu0 0
    %1123 = vmatpush2.bf16.msra.mxu0 0
    %1124 = vmatprep.subr.bf16.mxu0 0
    %1125 = vmatpush2.bf16.msra.mxu0 0
    %1126 = vmatprep.subr.bf16.mxu0 0
    %1127 = vmatpush2.bf16.msra.mxu0 0
    %1128 = vmatprep.subr.bf16.mxu0 0
    %1129 = vmatpush2.bf16.msra.mxu0 0
    %1130 = vmatprep.mubr.bf16.mxu0 0
    %1131 = vmatmul.mubr.bf16.gmra.mxu0 %v1096
    %v1132 = vpop.f32.mrf.mxu0
    %v1133 = vadd.f32 0.0, %v1132
    %v1134 = vpop.f32.mrf.mxu0
    %v1135 = vpop.f32.mrf.mxu0
    %v1136 = vpop.f32.mrf.mxu0
    %1137 = vdwg.mxu0
    %v1139 = vrot.slane %v1091, 1
    %1140 = vrot.lane.b32.xlu0 %v1139, 32
    %v1141 = vpop.permute.xlu0 %1140
    %v1143 = vsel %vm808, %v1141, 0
    %1145 = vmatprep.subr.bf16.mxu0 0
    %1146 = vmatpush1.bf16.msra.mxu0 0
    %1147 = vmatprep.subr.bf16.mxu0 0
    %1148 = vmatpush1.bf16.msra.mxu0 0
    %1149 = vmatprep.subr.bf16.mxu0 0
    %1150 = vmatpush1.bf16.msra.mxu0 0
    %1151 = vmatprep.subr.bf16.mxu0 0
    %1152 = vmatpush1.bf16.msra.mxu0 0
    %1153 = vmatprep.subr.bf16.mxu0 0
    %1154 = vmatpush1.bf16.msra.mxu0 0
    %1155 = vmatprep.subr.bf16.mxu0 0
    %1156 = vmatpush1.bf16.msra.mxu0 0
    %1157 = vmatprep.subr.bf16.mxu0 0
    %1158 = vmatpush1.bf16.msra.mxu0 %v942
    %1159 = vmatprep.subr.bf16.mxu0 0
    %1160 = vmatpush1.bf16.msra.mxu0 %v941
    %1161 = vmatprep.subr.bf16.mxu0 0
    %1162 = vmatpush2.bf16.msra.mxu0 0
    %1163 = vmatprep.subr.bf16.mxu0 0
    %1164 = vmatpush2.bf16.msra.mxu0 0
    %1165 = vmatprep.subr.bf16.mxu0 0
    %1166 = vmatpush2.bf16.msra.mxu0 0
    %1167 = vmatprep.subr.bf16.mxu0 0
    %1168 = vmatpush2.bf16.msra.mxu0 0
    %1169 = vmatprep.subr.bf16.mxu0 0
    %1170 = vmatpush2.bf16.msra.mxu0 0
    %1171 = vmatprep.subr.bf16.mxu0 0
    %1172 = vmatpush2.bf16.msra.mxu0 0
    %1173 = vmatprep.subr.bf16.mxu0 0
    %1174 = vmatpush2.bf16.msra.mxu0 0
    %1175 = vmatprep.subr.bf16.mxu0 0
    %1176 = vmatpush2.bf16.msra.mxu0 0
    %1177 = vmatprep.mubr.bf16.mxu0 0
    %1178 = vmatmul.mubr.bf16.gmra.mxu0 %v1143
    %v1179 = vpop.f32.mrf.mxu0
    %v1180 = vadd.f32 %v1133, %v1179
    %v1181 = vpop.f32.mrf.mxu0
    %v1182 = vpop.f32.mrf.mxu0
    %v1183 = vpop.f32.mrf.mxu0
    %1184 = vdwg.mxu0
    %v1185 = vadd.f32 %v1180, %v794
    %v1186 = vxor.u32 %v1185, 2147483648
    %v1187 = vmul.f32 %v1186, 1.442695
    %v1188 = vpow.pop %v1187
    %v1189 = vadd.f32 %v1188, 1.0
    %v1190 = vrcp.pop %v1189
    %v1191 = vmul.f32 1.0, %v1190
    %v1192 = vtanh.pop %v1185
    %v1193 = vmul.f32 %v1191, %v1006
    %1195 = vrot.lane.b32.xlu0 %v1192, 64
    %v1196 = vpop.permute.xlu0 %1195
    %v1198 = vmul.f32 %v1191, %v1196
    %1200 = vrot.lane.b32.xlu0 %v1198, 32
    %v1201 = vpop.permute.xlu0 %1200
    %v1203 = vadd.f32 %v1193, %v1201
    %v1204 = vtanh.pop %v1203
    %1206 = vrot.lane.b32.xlu0 %v1204, 64
    %v1207 = vpop.permute.xlu0 %1206
    %v1209 = vmul.f32 %v1191, %v1207
    %v1210 = vpack.c.bf16 %v1209, %v1209
    %1212 = vrot.lane.b32.xlu0 %v1209, 32
    %v1213 = vpop.permute.xlu0 %1212
    %s1215 = scalar_lea.vmem [#allocation5], 2
    %1216 = vst.msk [vmem:[%s1215] sm:$0x3] %vm1018, %v1213
    %1217 = vmatprep.subr.bf16.mxu0 0
    %1218 = vmatpush1.bf16.msra.mxu0 0
    %1219 = vmatprep.subr.bf16.mxu0 0
    %1220 = vmatpush1.bf16.msra.mxu0 0
    %1221 = vmatprep.subr.bf16.mxu0 0
    %1222 = vmatpush1.bf16.msra.mxu0 0
    %1223 = vmatprep.subr.bf16.mxu0 0
    %1224 = vmatpush1.bf16.msra.mxu0 0
    %1225 = vmatprep.subr.bf16.mxu0 0
    %1226 = vmatpush1.bf16.msra.mxu0 0
    %1227 = vmatprep.subr.bf16.mxu0 0
    %1228 = vmatpush1.bf16.msra.mxu0 0
    %1229 = vmatprep.subr.bf16.mxu0 0
    %1230 = vmatpush1.bf16.msra.mxu0 %v805
    %1231 = vmatprep.subr.bf16.mxu0 0
    %1232 = vmatpush1.bf16.msra.mxu0 %v804
    %1233 = vmatprep.subr.bf16.mxu0 0
    %1234 = vmatpush2.bf16.msra.mxu0 0
    %1235 = vmatprep.subr.bf16.mxu0 0
    %1236 = vmatpush2.bf16.msra.mxu0 0
    %1237 = vmatprep.subr.bf16.mxu0 0
    %1238 = vmatpush2.bf16.msra.mxu0 0
    %1239 = vmatprep.subr.bf16.mxu0 0
    %1240 = vmatpush2.bf16.msra.mxu0 0
    %1241 = vmatprep.subr.bf16.mxu0 0
    %1242 = vmatpush2.bf16.msra.mxu0 0
    %1243 = vmatprep.subr.bf16.mxu0 0
    %1244 = vmatpush2.bf16.msra.mxu0 0
    %1245 = vmatprep.subr.bf16.mxu0 0
    %1246 = vmatpush2.bf16.msra.mxu0 0
    %1247 = vmatprep.subr.bf16.mxu0 0
    %1248 = vmatpush2.bf16.msra.mxu0 0
    %1249 = vmatprep.mubr.bf16.mxu0 0
    %1250 = vmatmul.mubr.bf16.gmra.mxu0 %v1143
    %v1251 = vpop.f32.mrf.mxu0
    %v1252 = vadd.f32 0.0, %v1251
    %v1253 = vpop.f32.mrf.mxu0
    %v1254 = vpop.f32.mrf.mxu0
    %v1255 = vpop.f32.mrf.mxu0
    %1256 = vdwg.mxu0
    %v1258 = vrot.slane %v1252, 4
    %v1260 = vadd.f32 %v771, %v1258
    %v1261 = vxor.u32 %v1260, 2147483648
    %v1262 = vmul.f32 %v1261, 1.442695
    %v1263 = vpow.pop %v1262
    %v1264 = vadd.f32 %v1263, 1.0
    %v1265 = vrcp.pop %v1264
    %v1266 = vmul.f32 1.0, %v1265
    %v1267 = vtanh.pop %v1260
    %v1269 = vrot.slane %v1084, 6
    %v1271 = vmul.f32 %v1266, %v1269
    %1273 = vrot.lane.b32.xlu0 %v1267, 64
    %v1274 = vpop.permute.xlu0 %1273
    %v1276 = vmul.f32 %v1266, %v1274
    %1278 = vrot.lane.b32.xlu0 %v1276, 32
    %v1279 = vpop.permute.xlu0 %1278
    %v1281 = vadd.f32 %v1271, %v1279
    %v1282 = vtanh.pop %v1281
    %1284 = vrot.lane.b32.xlu0 %v1282, 64
    %v1285 = vpop.permute.xlu0 %1284
    %v1287 = vmul.f32 %v1266, %v1285
    %v1288 = vpack.c.bf16 %v1287, %v1287
    %1290 = vrot.lane.b32.xlu0 %v1210, 32
    %v1291 = vpop.permute.xlu0 %1290
    %v1293 = vsel %vm808, %v1291, 0
    %1295 = vmatprep.subr.bf16.mxu0 0
    %1296 = vmatpush1.bf16.msra.mxu0 0
    %1297 = vmatprep.subr.bf16.mxu0 0
    %1298 = vmatpush1.bf16.msra.mxu0 0
    %1299 = vmatprep.subr.bf16.mxu0 0
    %1300 = vmatpush1.bf16.msra.mxu0 0
    %1301 = vmatprep.subr.bf16.mxu0 0
    %1302 = vmatpush1.bf16.msra.mxu0 0
    %1303 = vmatprep.subr.bf16.mxu0 0
    %1304 = vmatpush1.bf16.msra.mxu0 0
    %1305 = vmatprep.subr.bf16.mxu0 0
    %1306 = vmatpush1.bf16.msra.mxu0 0
    %1307 = vmatprep.subr.bf16.mxu0 0
    %1308 = vmatpush1.bf16.msra.mxu0 %v887
    %1309 = vmatprep.subr.bf16.mxu0 0
    %1310 = vmatpush1.bf16.msra.mxu0 %v886
    %1311 = vmatprep.subr.bf16.mxu0 0
    %1312 = vmatpush2.bf16.msra.mxu0 0
    %1313 = vmatprep.subr.bf16.mxu0 0
    %1314 = vmatpush2.bf16.msra.mxu0 0
    %1315 = vmatprep.subr.bf16.mxu0 0
    %1316 = vmatpush2.bf16.msra.mxu0 0
    %1317 = vmatprep.subr.bf16.mxu0 0
    %1318 = vmatpush2.bf16.msra.mxu0 0
    %1319 = vmatprep.subr.bf16.mxu0 0
    %1320 = vmatpush2.bf16.msra.mxu0 0
    %1321 = vmatprep.subr.bf16.mxu0 0
    %1322 = vmatpush2.bf16.msra.mxu0 0
    %1323 = vmatprep.subr.bf16.mxu0 0
    %1324 = vmatpush2.bf16.msra.mxu0 0
    %1325 = vmatprep.subr.bf16.mxu0 0
    %1326 = vmatpush2.bf16.msra.mxu0 0
    %1327 = vmatprep.mubr.bf16.mxu0 0
    %1328 = vmatmul.mubr.bf16.gmra.mxu0 %v1293
    %v1329 = vpop.f32.mrf.mxu0
    %v1330 = vadd.f32 0.0, %v1329
    %v1331 = vpop.f32.mrf.mxu0
    %v1332 = vpop.f32.mrf.mxu0
    %v1333 = vpop.f32.mrf.mxu0
    %1334 = vdwg.mxu0
    %v1336 = vrot.slane %v1288, 2
    %1337 = vrot.lane.b32.xlu0 %v1336, 32
    %v1338 = vpop.permute.xlu0 %1337
    %v1340 = vsel %vm808, %v1338, 0
    %1342 = vmatprep.subr.bf16.mxu0 0
    %1343 = vmatpush1.bf16.msra.mxu0 0
    %1344 = vmatprep.subr.bf16.mxu0 0
    %1345 = vmatpush1.bf16.msra.mxu0 0
    %1346 = vmatprep.subr.bf16.mxu0 0
    %1347 = vmatpush1.bf16.msra.mxu0 0
    %1348 = vmatprep.subr.bf16.mxu0 0
    %1349 = vmatpush1.bf16.msra.mxu0 0
    %1350 = vmatprep.subr.bf16.mxu0 0
    %1351 = vmatpush1.bf16.msra.mxu0 0
    %1352 = vmatprep.subr.bf16.mxu0 0
    %1353 = vmatpush1.bf16.msra.mxu0 0
    %1354 = vmatprep.subr.bf16.mxu0 0
    %1355 = vmatpush1.bf16.msra.mxu0 %v942
    %1356 = vmatprep.subr.bf16.mxu0 0
    %1357 = vmatpush1.bf16.msra.mxu0 %v941
    %1358 = vmatprep.subr.bf16.mxu0 0
    %1359 = vmatpush2.bf16.msra.mxu0 0
    %1360 = vmatprep.subr.bf16.mxu0 0
    %1361 = vmatpush2.bf16.msra.mxu0 0
    %1362 = vmatprep.subr.bf16.mxu0 0
    %1363 = vmatpush2.bf16.msra.mxu0 0
    %1364 = vmatprep.subr.bf16.mxu0 0
    %1365 = vmatpush2.bf16.msra.mxu0 0
    %1366 = vmatprep.subr.bf16.mxu0 0
    %1367 = vmatpush2.bf16.msra.mxu0 0
    %1368 = vmatprep.subr.bf16.mxu0 0
    %1369 = vmatpush2.bf16.msra.mxu0 0
    %1370 = vmatprep.subr.bf16.mxu0 0
    %1371 = vmatpush2.bf16.msra.mxu0 0
    %1372 = vmatprep.subr.bf16.mxu0 0
    %1373 = vmatpush2.bf16.msra.mxu0 0
    %1374 = vmatprep.mubr.bf16.mxu0 0
    %1375 = vmatmul.mubr.bf16.gmra.mxu0 %v1340
    %v1376 = vpop.f32.mrf.mxu0
    %v1377 = vadd.f32 %v1330, %v1376
    %v1378 = vpop.f32.mrf.mxu0
    %v1379 = vpop.f32.mrf.mxu0
    %v1380 = vpop.f32.mrf.mxu0
    %1381 = vdwg.mxu0
    %v1382 = vadd.f32 %v1377, %v794
    %v1383 = vxor.u32 %v1382, 2147483648
    %v1384 = vmul.f32 %v1383, 1.442695
    %v1385 = vpow.pop %v1384
    %v1386 = vadd.f32 %v1385, 1.0
    %v1387 = vrcp.pop %v1386
    %v1388 = vmul.f32 1.0, %v1387
    %v1389 = vtanh.pop %v1382
    %v1390 = vmul.f32 %v1388, %v1203
    %1392 = vrot.lane.b32.xlu0 %v1389, 64
    %v1393 = vpop.permute.xlu0 %1392
    %v1395 = vmul.f32 %v1388, %v1393
    %1397 = vrot.lane.b32.xlu0 %v1395, 32
    %v1398 = vpop.permute.xlu0 %1397
    %v1400 = vadd.f32 %v1390, %v1398
    %v1401 = vtanh.pop %v1400
    %1403 = vrot.lane.b32.xlu0 %v1401, 64
    %v1404 = vpop.permute.xlu0 %1403
    %v1406 = vmul.f32 %v1388, %v1404
    %v1407 = vpack.c.bf16 %v1406, %v1406
    %1409 = vrot.lane.b32.xlu0 %v1406, 32
    %v1410 = vpop.permute.xlu0 %1409
    %s1412 = scalar_lea.vmem [#allocation5], 4
    %1413 = vst.msk [vmem:[%s1412] sm:$0x3] %vm1018, %v1410
    %1414 = vmatprep.subr.bf16.mxu0 0
    %1415 = vmatpush1.bf16.msra.mxu0 0
    %1416 = vmatprep.subr.bf16.mxu0 0
    %1417 = vmatpush1.bf16.msra.mxu0 0
    %1418 = vmatprep.subr.bf16.mxu0 0
    %1419 = vmatpush1.bf16.msra.mxu0 0
    %1420 = vmatprep.subr.bf16.mxu0 0
    %1421 = vmatpush1.bf16.msra.mxu0 0
    %1422 = vmatprep.subr.bf16.mxu0 0
    %1423 = vmatpush1.bf16.msra.mxu0 0
    %1424 = vmatprep.subr.bf16.mxu0 0
    %1425 = vmatpush1.bf16.msra.mxu0 0
    %1426 = vmatprep.subr.bf16.mxu0 0
    %1427 = vmatpush1.bf16.msra.mxu0 %v805
    %1428 = vmatprep.subr.bf16.mxu0 0
    %1429 = vmatpush1.bf16.msra.mxu0 %v804
    %1430 = vmatprep.subr.bf16.mxu0 0
    %1431 = vmatpush2.bf16.msra.mxu0 0
    %1432 = vmatprep.subr.bf16.mxu0 0
    %1433 = vmatpush2.bf16.msra.mxu0 0
    %1434 = vmatprep.subr.bf16.mxu0 0
    %1435 = vmatpush2.bf16.msra.mxu0 0
    %1436 = vmatprep.subr.bf16.mxu0 0
    %1437 = vmatpush2.bf16.msra.mxu0 0
    %1438 = vmatprep.subr.bf16.mxu0 0
    %1439 = vmatpush2.bf16.msra.mxu0 0
    %1440 = vmatprep.subr.bf16.mxu0 0
    %1441 = vmatpush2.bf16.msra.mxu0 0
    %1442 = vmatprep.subr.bf16.mxu0 0
    %1443 = vmatpush2.bf16.msra.mxu0 0
    %1444 = vmatprep.subr.bf16.mxu0 0
    %1445 = vmatpush2.bf16.msra.mxu0 0
    %1446 = vmatprep.mubr.bf16.mxu0 0
    %1447 = vmatmul.mubr.bf16.gmra.mxu0 %v1340
    %v1448 = vpop.f32.mrf.mxu0
    %v1449 = vadd.f32 0.0, %v1448
    %v1450 = vpop.f32.mrf.mxu0
    %v1451 = vpop.f32.mrf.mxu0
    %v1452 = vpop.f32.mrf.mxu0
    %1453 = vdwg.mxu0
    %v1455 = vrot.slane %v1449, 2
    %v1457 = vadd.f32 %v771, %v1455
    %v1458 = vxor.u32 %v1457, 2147483648
    %v1459 = vmul.f32 %v1458, 1.442695
    %v1460 = vpow.pop %v1459
    %v1461 = vadd.f32 %v1460, 1.0
    %v1462 = vrcp.pop %v1461
    %v1463 = vmul.f32 1.0, %v1462
    %v1464 = vtanh.pop %v1457
    %v1466 = vrot.slane %v1281, 6
    %v1468 = vmul.f32 %v1463, %v1466
    %1470 = vrot.lane.b32.xlu0 %v1464, 64
    %v1471 = vpop.permute.xlu0 %1470
    %v1473 = vmul.f32 %v1463, %v1471
    %1475 = vrot.lane.b32.xlu0 %v1473, 32
    %v1476 = vpop.permute.xlu0 %1475
    %v1478 = vadd.f32 %v1468, %v1476
    %v1479 = vtanh.pop %v1478
    %1481 = vrot.lane.b32.xlu0 %v1479, 64
    %v1482 = vpop.permute.xlu0 %1481
    %v1484 = vmul.f32 %v1463, %v1482
    %v1485 = vpack.c.bf16 %v1484, %v1484
    %1487 = vrot.lane.b32.xlu0 %v1407, 32
    %v1488 = vpop.permute.xlu0 %1487
    %v1490 = vsel %vm808, %v1488, 0
    %1492 = vmatprep.subr.bf16.mxu0 0
    %1493 = vmatpush1.bf16.msra.mxu0 0
    %1494 = vmatprep.subr.bf16.mxu0 0
    %1495 = vmatpush1.bf16.msra.mxu0 0
    %1496 = vmatprep.subr.bf16.mxu0 0
    %1497 = vmatpush1.bf16.msra.mxu0 0
    %1498 = vmatprep.subr.bf16.mxu0 0
    %1499 = vmatpush1.bf16.msra.mxu0 0
    %1500 = vmatprep.subr.bf16.mxu0 0
    %1501 = vmatpush1.bf16.msra.mxu0 0
    %1502 = vmatprep.subr.bf16.mxu0 0
    %1503 = vmatpush1.bf16.msra.mxu0 0
    %1504 = vmatprep.subr.bf16.mxu0 0
    %1505 = vmatpush1.bf16.msra.mxu0 %v887
    %1506 = vmatprep.subr.bf16.mxu0 0
    %1507 = vmatpush1.bf16.msra.mxu0 %v886
    %1508 = vmatprep.subr.bf16.mxu0 0
    %1509 = vmatpush2.bf16.msra.mxu0 0
    %1510 = vmatprep.subr.bf16.mxu0 0
    %1511 = vmatpush2.bf16.msra.mxu0 0
    %1512 = vmatprep.subr.bf16.mxu0 0
    %1513 = vmatpush2.bf16.msra.mxu0 0
    %1514 = vmatprep.subr.bf16.mxu0 0
    %1515 = vmatpush2.bf16.msra.mxu0 0
    %1516 = vmatprep.subr.bf16.mxu0 0
    %1517 = vmatpush2.bf16.msra.mxu0 0
    %1518 = vmatprep.subr.bf16.mxu0 0
    %1519 = vmatpush2.bf16.msra.mxu0 0
    %1520 = vmatprep.subr.bf16.mxu0 0
    %1521 = vmatpush2.bf16.msra.mxu0 0
    %1522 = vmatprep.subr.bf16.mxu0 0
    %1523 = vmatpush2.bf16.msra.mxu0 0
    %1524 = vmatprep.mubr.bf16.mxu0 0
    %1525 = vmatmul.mubr.bf16.gmra.mxu0 %v1490
    %v1526 = vpop.f32.mrf.mxu0
    %v1527 = vadd.f32 0.0, %v1526
    %v1528 = vpop.f32.mrf.mxu0
    %v1529 = vpop.f32.mrf.mxu0
    %v1530 = vpop.f32.mrf.mxu0
    %1531 = vdwg.mxu0
    %v1533 = vrot.slane %v1485, 3
    %1534 = vrot.lane.b32.xlu0 %v1533, 32
    %v1535 = vpop.permute.xlu0 %1534
    %v1537 = vsel %vm808, %v1535, 0
    %1539 = vmatprep.subr.bf16.mxu0 0
    %1540 = vmatpush1.bf16.msra.mxu0 0
    %1541 = vmatprep.subr.bf16.mxu0 0
    %1542 = vmatpush1.bf16.msra.mxu0 0
    %1543 = vmatprep.subr.bf16.mxu0 0
    %1544 = vmatpush1.bf16.msra.mxu0 0
    %1545 = vmatprep.subr.bf16.mxu0 0
    %1546 = vmatpush1.bf16.msra.mxu0 0
    %1547 = vmatprep.subr.bf16.mxu0 0
    %1548 = vmatpush1.bf16.msra.mxu0 0
    %1549 = vmatprep.subr.bf16.mxu0 0
    %1550 = vmatpush1.bf16.msra.mxu0 0
    %1551 = vmatprep.subr.bf16.mxu0 0
    %1552 = vmatpush1.bf16.msra.mxu0 %v942
    %1553 = vmatprep.subr.bf16.mxu0 0
    %1554 = vmatpush1.bf16.msra.mxu0 %v941
    %1555 = vmatprep.subr.bf16.mxu0 0
    %1556 = vmatpush2.bf16.msra.mxu0 0
    %1557 = vmatprep.subr.bf16.mxu0 0
    %1558 = vmatpush2.bf16.msra.mxu0 0
    %1559 = vmatprep.subr.bf16.mxu0 0
    %1560 = vmatpush2.bf16.msra.mxu0 0
    %1561 = vmatprep.subr.bf16.mxu0 0
    %1562 = vmatpush2.bf16.msra.mxu0 0
    %1563 = vmatprep.subr.bf16.mxu0 0
    %1564 = vmatpush2.bf16.msra.mxu0 0
    %1565 = vmatprep.subr.bf16.mxu0 0
    %1566 = vmatpush2.bf16.msra.mxu0 0
    %1567 = vmatprep.subr.bf16.mxu0 0
    %1568 = vmatpush2.bf16.msra.mxu0 0
    %1569 = vmatprep.subr.bf16.mxu0 0
    %1570 = vmatpush2.bf16.msra.mxu0 0
    %1571 = vmatprep.mubr.bf16.mxu0 0
    %1572 = vmatmul.mubr.bf16.gmra.mxu0 %v1537
    %v1573 = vpop.f32.mrf.mxu0
    %v1574 = vadd.f32 %v1527, %v1573
    %v1575 = vpop.f32.mrf.mxu0
    %v1576 = vpop.f32.mrf.mxu0
    %v1577 = vpop.f32.mrf.mxu0
    %1578 = vdwg.mxu0
    %v1579 = vadd.f32 %v1574, %v794
    %v1580 = vxor.u32 %v1579, 2147483648
    %v1581 = vmul.f32 %v1580, 1.442695
    %v1582 = vpow.pop %v1581
    %v1583 = vadd.f32 %v1582, 1.0
    %v1584 = vrcp.pop %v1583
    %v1585 = vmul.f32 1.0, %v1584
    %v1586 = vtanh.pop %v1579
    %v1587 = vmul.f32 %v1585, %v1400
    %1589 = vrot.lane.b32.xlu0 %v1586, 64
    %v1590 = vpop.permute.xlu0 %1589
    %v1592 = vmul.f32 %v1585, %v1590
    %1594 = vrot.lane.b32.xlu0 %v1592, 32
    %v1595 = vpop.permute.xlu0 %1594
    %v1597 = vadd.f32 %v1587, %v1595
    %v1598 = vtanh.pop %v1597
    %1600 = vrot.lane.b32.xlu0 %v1598, 64
    %v1601 = vpop.permute.xlu0 %1600
    %v1603 = vmul.f32 %v1585, %v1601
    %v1604 = vpack.c.bf16 %v1603, %v1603
    %1606 = vrot.lane.b32.xlu0 %v1603, 32
    %v1607 = vpop.permute.xlu0 %1606
    %s1609 = scalar_lea.vmem [#allocation5], 6
    %1610 = vst.msk [vmem:[%s1609] sm:$0x3] %vm1018, %v1607
    %1611 = vmatprep.subr.bf16.mxu0 0
    %1612 = vmatpush1.bf16.msra.mxu0 0
    %1613 = vmatprep.subr.bf16.mxu0 0
    %1614 = vmatpush1.bf16.msra.mxu0 0
    %1615 = vmatprep.subr.bf16.mxu0 0
    %1616 = vmatpush1.bf16.msra.mxu0 0
    %1617 = vmatprep.subr.bf16.mxu0 0
    %1618 = vmatpush1.bf16.msra.mxu0 0
    %1619 = vmatprep.subr.bf16.mxu0 0
    %1620 = vmatpush1.bf16.msra.mxu0 0
    %1621 = vmatprep.subr.bf16.mxu0 0
    %1622 = vmatpush1.bf16.msra.mxu0 0
    %1623 = vmatprep.subr.bf16.mxu0 0
    %1624 = vmatpush1.bf16.msra.mxu0 %v805
    %1625 = vmatprep.subr.bf16.mxu0 0
    %1626 = vmatpush1.bf16.msra.mxu0 %v804
    %1627 = vmatprep.subr.bf16.mxu0 0
    %1628 = vmatpush2.bf16.msra.mxu0 0
    %1629 = vmatprep.subr.bf16.mxu0 0
    %1630 = vmatpush2.bf16.msra.mxu0 0
    %1631 = vmatprep.subr.bf16.mxu0 0
    %1632 = vmatpush2.bf16.msra.mxu0 0
    %1633 = vmatprep.subr.bf16.mxu0 0
    %1634 = vmatpush2.bf16.msra.mxu0 0
    %1635 = vmatprep.subr.bf16.mxu0 0
    %1636 = vmatpush2.bf16.msra.mxu0 0
    %1637 = vmatprep.subr.bf16.mxu0 0
    %1638 = vmatpush2.bf16.msra.mxu0 0
    %1639 = vmatprep.subr.bf16.mxu0 0
    %1640 = vmatpush2.bf16.msra.mxu0 0
    %1641 = vmatprep.subr.bf16.mxu0 0
    %1642 = vmatpush2.bf16.msra.mxu0 0
    %1643 = vmatprep.mubr.bf16.mxu0 0
    %1644 = vmatmul.mubr.bf16.gmra.mxu0 %v1537
    %v1645 = vpop.f32.mrf.mxu0
    %v1646 = vadd.f32 0.0, %v1645
    %v1647 = vpop.f32.mrf.mxu0
    %v1648 = vpop.f32.mrf.mxu0
    %v1649 = vpop.f32.mrf.mxu0
    %1650 = vdwg.mxu0
    %v1651 = vadd.f32 %v774, %v1646
    %v1652 = vxor.u32 %v1651, 2147483648
    %v1653 = vmul.f32 %v1652, 1.442695
    %v1654 = vpow.pop %v1653
    %v1655 = vadd.f32 %v1654, 1.0
    %v1656 = vrcp.pop %v1655
    %v1657 = vmul.f32 1.0, %v1656
    %v1658 = vtanh.pop %v1651
    %v1660 = vrot.slane %v1478, 6
    %v1662 = vmul.f32 %v1657, %v1660
    %1664 = vrot.lane.b32.xlu0 %v1658, 64
    %v1665 = vpop.permute.xlu0 %1664
    %v1667 = vmul.f32 %v1657, %v1665
    %1669 = vrot.lane.b32.xlu0 %v1667, 32
    %v1670 = vpop.permute.xlu0 %1669
    %v1672 = vadd.f32 %v1662, %v1670
    %v1673 = vtanh.pop %v1672
    %1675 = vrot.lane.b32.xlu0 %v1673, 64
    %v1676 = vpop.permute.xlu0 %1675
    %v1678 = vmul.f32 %v1657, %v1676
    %v1679 = vpack.c.bf16 %v1678, %v1678
    %1681 = vrot.lane.b32.xlu0 %v1604, 32
    %v1682 = vpop.permute.xlu0 %1681
    %v1684 = vsel %vm808, %v1682, 0
    %1686 = vmatprep.subr.bf16.mxu0 0
    %1687 = vmatpush1.bf16.msra.mxu0 0
    %1688 = vmatprep.subr.bf16.mxu0 0
    %1689 = vmatpush1.bf16.msra.mxu0 0
    %1690 = vmatprep.subr.bf16.mxu0 0
    %1691 = vmatpush1.bf16.msra.mxu0 0
    %1692 = vmatprep.subr.bf16.mxu0 0
    %1693 = vmatpush1.bf16.msra.mxu0 0
    %1694 = vmatprep.subr.bf16.mxu0 0
    %1695 = vmatpush1.bf16.msra.mxu0 0
    %1696 = vmatprep.subr.bf16.mxu0 0
    %1697 = vmatpush1.bf16.msra.mxu0 0
    %1698 = vmatprep.subr.bf16.mxu0 0
    %1699 = vmatpush1.bf16.msra.mxu0 %v887
    %1700 = vmatprep.subr.bf16.mxu0 0
    %1701 = vmatpush1.bf16.msra.mxu0 %v886
    %1702 = vmatprep.subr.bf16.mxu0 0
    %1703 = vmatpush2.bf16.msra.mxu0 0
    %1704 = vmatprep.subr.bf16.mxu0 0
    %1705 = vmatpush2.bf16.msra.mxu0 0
    %1706 = vmatprep.subr.bf16.mxu0 0
    %1707 = vmatpush2.bf16.msra.mxu0 0
    %1708 = vmatprep.subr.bf16.mxu0 0
    %1709 = vmatpush2.bf16.msra.mxu0 0
    %1710 = vmatprep.subr.bf16.mxu0 0
    %1711 = vmatpush2.bf16.msra.mxu0 0
    %1712 = vmatprep.subr.bf16.mxu0 0
    %1713 = vmatpush2.bf16.msra.mxu0 0
    %1714 = vmatprep.subr.bf16.mxu0 0
    %1715 = vmatpush2.bf16.msra.mxu0 0
    %1716 = vmatprep.subr.bf16.mxu0 0
    %1717 = vmatpush2.bf16.msra.mxu0 0
    %1718 = vmatprep.mubr.bf16.mxu0 0
    %1719 = vmatmul.mubr.bf16.gmra.mxu0 %v1684
    %v1720 = vpop.f32.mrf.mxu0
    %v1721 = vadd.f32 0.0, %v1720
    %v1722 = vpop.f32.mrf.mxu0
    %v1723 = vpop.f32.mrf.mxu0
    %v1724 = vpop.f32.mrf.mxu0
    %1725 = vdwg.mxu0
    %1727 = vrot.lane.b32.xlu0 %v1679, 32
    %v1728 = vpop.permute.xlu0 %1727
    %v1730 = vsel %vm808, %v1728, 0
    %1732 = vmatprep.subr.bf16.mxu0 0
    %1733 = vmatpush1.bf16.msra.mxu0 0
    %1734 = vmatprep.subr.bf16.mxu0 0
    %1735 = vmatpush1.bf16.msra.mxu0 0
    %1736 = vmatprep.subr.bf16.mxu0 0
    %1737 = vmatpush1.bf16.msra.mxu0 0
    %1738 = vmatprep.subr.bf16.mxu0 0
    %1739 = vmatpush1.bf16.msra.mxu0 0
    %1740 = vmatprep.subr.bf16.mxu0 0
    %1741 = vmatpush1.bf16.msra.mxu0 0
    %1742 = vmatprep.subr.bf16.mxu0 0
    %1743 = vmatpush1.bf16.msra.mxu0 0
    %1744 = vmatprep.subr.bf16.mxu0 0
    %1745 = vmatpush1.bf16.msra.mxu0 %v942
    %1746 = vmatprep.subr.bf16.mxu0 0
    %1747 = vmatpush1.bf16.msra.mxu0 %v941
    %1748 = vmatprep.subr.bf16.mxu0 0
    %1749 = vmatpush2.bf16.msra.mxu0 0
    %1750 = vmatprep.subr.bf16.mxu0 0
    %1751 = vmatpush2.bf16.msra.mxu0 0
    %1752 = vmatprep.subr.bf16.mxu0 0
    %1753 = vmatpush2.bf16.msra.mxu0 0
    %1754 = vmatprep.subr.bf16.mxu0 0
    %1755 = vmatpush2.bf16.msra.mxu0 0
    %1756 = vmatprep.subr.bf16.mxu0 0
    %1757 = vmatpush2.bf16.msra.mxu0 0
    %1758 = vmatprep.subr.bf16.mxu0 0
    %1759 = vmatpush2.bf16.msra.mxu0 0
    %1760 = vmatprep.subr.bf16.mxu0 0
    %1761 = vmatpush2.bf16.msra.mxu0 0
    %1762 = vmatprep.subr.bf16.mxu0 0
    %1763 = vmatpush2.bf16.msra.mxu0 0
    %1764 = vmatprep.mubr.bf16.mxu0 0
    %1765 = vmatmul.mubr.bf16.gmra.mxu0 %v1730
    %v1766 = vpop.f32.mrf.mxu0
    %v1767 = vadd.f32 %v1721, %v1766
    %v1768 = vpop.f32.mrf.mxu0
    %v1769 = vpop.f32.mrf.mxu0
    %v1770 = vpop.f32.mrf.mxu0
    %1771 = vdwg.mxu0
    %v1772 = vadd.f32 %v1767, %v794
    %v1773 = vxor.u32 %v1772, 2147483648
    %v1774 = vmul.f32 %v1773, 1.442695
    %v1775 = vpow.pop %v1774
    %v1776 = vadd.f32 %v1775, 1.0
    %v1777 = vrcp.pop %v1776
    %v1778 = vmul.f32 1.0, %v1777
    %v1779 = vtanh.pop %v1772
    %v1780 = vmul.f32 %v1778, %v1597
    %1782 = vrot.lane.b32.xlu0 %v1779, 64
    %v1783 = vpop.permute.xlu0 %1782
    %v1785 = vmul.f32 %v1778, %v1783
    %1787 = vrot.lane.b32.xlu0 %v1785, 32
    %v1788 = vpop.permute.xlu0 %1787
    %v1790 = vadd.f32 %v1780, %v1788
    %v1791 = vtanh.pop %v1790
    %1793 = vrot.lane.b32.xlu0 %v1791, 64
    %v1794 = vpop.permute.xlu0 %1793
    %v1796 = vmul.f32 %v1778, %v1794
    %v1797 = vpack.c.bf16 %v1796, %v1796
    %1799 = vrot.lane.b32.xlu0 %v1796, 32
    %v1800 = vpop.permute.xlu0 %1799
    %s1802 = scalar_lea.vmem [#allocation5], 8
    %1803 = vst.msk [vmem:[%s1802] sm:$0x3] %vm1018, %v1800
    %1804 = vmatprep.subr.bf16.mxu0 0
    %1805 = vmatpush1.bf16.msra.mxu0 0
    %1806 = vmatprep.subr.bf16.mxu0 0
    %1807 = vmatpush1.bf16.msra.mxu0 0
    %1808 = vmatprep.subr.bf16.mxu0 0
    %1809 = vmatpush1.bf16.msra.mxu0 0
    %1810 = vmatprep.subr.bf16.mxu0 0
    %1811 = vmatpush1.bf16.msra.mxu0 0
    %1812 = vmatprep.subr.bf16.mxu0 0
    %1813 = vmatpush1.bf16.msra.mxu0 0
    %1814 = vmatprep.subr.bf16.mxu0 0
    %1815 = vmatpush1.bf16.msra.mxu0 0
    %1816 = vmatprep.subr.bf16.mxu0 0
    %1817 = vmatpush1.bf16.msra.mxu0 %v805
    %1818 = vmatprep.subr.bf16.mxu0 0
    %1819 = vmatpush1.bf16.msra.mxu0 %v804
    %1820 = vmatprep.subr.bf16.mxu0 0
    %1821 = vmatpush2.bf16.msra.mxu0 0
    %1822 = vmatprep.subr.bf16.mxu0 0
    %1823 = vmatpush2.bf16.msra.mxu0 0
    %1824 = vmatprep.subr.bf16.mxu0 0
    %1825 = vmatpush2.bf16.msra.mxu0 0
    %1826 = vmatprep.subr.bf16.mxu0 0
    %1827 = vmatpush2.bf16.msra.mxu0 0
    %1828 = vmatprep.subr.bf16.mxu0 0
    %1829 = vmatpush2.bf16.msra.mxu0 0
    %1830 = vmatprep.subr.bf16.mxu0 0
    %1831 = vmatpush2.bf16.msra.mxu0 0
    %1832 = vmatprep.subr.bf16.mxu0 0
    %1833 = vmatpush2.bf16.msra.mxu0 0
    %1834 = vmatprep.subr.bf16.mxu0 0
    %1835 = vmatpush2.bf16.msra.mxu0 0
    %1836 = vmatprep.mubr.bf16.mxu0 0
    %1837 = vmatmul.mubr.bf16.gmra.mxu0 %v1730
    %v1838 = vpop.f32.mrf.mxu0
    %v1839 = vadd.f32 0.0, %v1838
    %v1840 = vpop.f32.mrf.mxu0
    %v1841 = vpop.f32.mrf.mxu0
    %v1842 = vpop.f32.mrf.mxu0
    %1843 = vdwg.mxu0
    %v1845 = vrot.slane %v1839, 6
    %v1847 = vadd.f32 %v774, %v1845
    %v1848 = vxor.u32 %v1847, 2147483648
    %v1849 = vmul.f32 %v1848, 1.442695
    %v1850 = vpow.pop %v1849
    %v1851 = vadd.f32 %v1850, 1.0
    %v1852 = vrcp.pop %v1851
    %v1853 = vmul.f32 1.0, %v1852
    %v1854 = vtanh.pop %v1847
    %v1856 = vrot.slane %v1672, 6
    %v1858 = vmul.f32 %v1853, %v1856
    %1860 = vrot.lane.b32.xlu0 %v1854, 64
    %v1861 = vpop.permute.xlu0 %1860
    %v1863 = vmul.f32 %v1853, %v1861
    %1865 = vrot.lane.b32.xlu0 %v1863, 32
    %v1866 = vpop.permute.xlu0 %1865
    %v1868 = vadd.f32 %v1858, %v1866
    %v1869 = vtanh.pop %v1868
    %1871 = vrot.lane.b32.xlu0 %v1869, 64
    %v1872 = vpop.permute.xlu0 %1871
    %v1874 = vmul.f32 %v1853, %v1872
    %v1875 = vpack.c.bf16 %v1874, %v1874
    %1877 = vrot.lane.b32.xlu0 %v1797, 32
    %v1878 = vpop.permute.xlu0 %1877
    %v1880 = vsel %vm808, %v1878, 0
    %1882 = vmatprep.subr.bf16.mxu0 0
    %1883 = vmatpush1.bf16.msra.mxu0 0
    %1884 = vmatprep.subr.bf16.mxu0 0
    %1885 = vmatpush1.bf16.msra.mxu0 0
    %1886 = vmatprep.subr.bf16.mxu0 0
    %1887 = vmatpush1.bf16.msra.mxu0 0
    %1888 = vmatprep.subr.bf16.mxu0 0
    %1889 = vmatpush1.bf16.msra.mxu0 0
    %1890 = vmatprep.subr.bf16.mxu0 0
    %1891 = vmatpush1.bf16.msra.mxu0 0
    %1892 = vmatprep.subr.bf16.mxu0 0
    %1893 = vmatpush1.bf16.msra.mxu0 0
    %1894 = vmatprep.subr.bf16.mxu0 0
    %1895 = vmatpush1.bf16.msra.mxu0 %v887
    %1896 = vmatprep.subr.bf16.mxu0 0
    %1897 = vmatpush1.bf16.msra.mxu0 %v886
    %1898 = vmatprep.subr.bf16.mxu0 0
    %1899 = vmatpush2.bf16.msra.mxu0 0
    %1900 = vmatprep.subr.bf16.mxu0 0
    %1901 = vmatpush2.bf16.msra.mxu0 0
    %1902 = vmatprep.subr.bf16.mxu0 0
    %1903 = vmatpush2.bf16.msra.mxu0 0
    %1904 = vmatprep.subr.bf16.mxu0 0
    %1905 = vmatpush2.bf16.msra.mxu0 0
    %1906 = vmatprep.subr.bf16.mxu0 0
    %1907 = vmatpush2.bf16.msra.mxu0 0
    %1908 = vmatprep.subr.bf16.mxu0 0
    %1909 = vmatpush2.bf16.msra.mxu0 0
    %1910 = vmatprep.subr.bf16.mxu0 0
    %1911 = vmatpush2.bf16.msra.mxu0 0
    %1912 = vmatprep.subr.bf16.mxu0 0
    %1913 = vmatpush2.bf16.msra.mxu0 0
    %1914 = vmatprep.mubr.bf16.mxu0 0
    %1915 = vmatmul.mubr.bf16.gmra.mxu0 %v1880
    %v1916 = vpop.f32.mrf.mxu0
    %v1917 = vadd.f32 0.0, %v1916
    %v1918 = vpop.f32.mrf.mxu0
    %v1919 = vpop.f32.mrf.mxu0
    %v1920 = vpop.f32.mrf.mxu0
    %1921 = vdwg.mxu0
    %v1923 = vrot.slane %v1875, 1
    %1924 = vrot.lane.b32.xlu0 %v1923, 32
    %v1925 = vpop.permute.xlu0 %1924
    %v1927 = vsel %vm808, %v1925, 0
    %1929 = vmatprep.subr.bf16.mxu0 0
    %1930 = vmatpush1.bf16.msra.mxu0 0
    %1931 = vmatprep.subr.bf16.mxu0 0
    %1932 = vmatpush1.bf16.msra.mxu0 0
    %1933 = vmatprep.subr.bf16.mxu0 0
    %1934 = vmatpush1.bf16.msra.mxu0 0
    %1935 = vmatprep.subr.bf16.mxu0 0
    %1936 = vmatpush1.bf16.msra.mxu0 0
    %1937 = vmatprep.subr.bf16.mxu0 0
    %1938 = vmatpush1.bf16.msra.mxu0 0
    %1939 = vmatprep.subr.bf16.mxu0 0
    %1940 = vmatpush1.bf16.msra.mxu0 0
    %1941 = vmatprep.subr.bf16.mxu0 0
    %1942 = vmatpush1.bf16.msra.mxu0 %v942
    %1943 = vmatprep.subr.bf16.mxu0 0
    %1944 = vmatpush1.bf16.msra.mxu0 %v941
    %1945 = vmatprep.subr.bf16.mxu0 0
    %1946 = vmatpush2.bf16.msra.mxu0 0
    %1947 = vmatprep.subr.bf16.mxu0 0
    %1948 = vmatpush2.bf16.msra.mxu0 0
    %1949 = vmatprep.subr.bf16.mxu0 0
    %1950 = vmatpush2.bf16.msra.mxu0 0
    %1951 = vmatprep.subr.bf16.mxu0 0
    %1952 = vmatpush2.bf16.msra.mxu0 0
    %1953 = vmatprep.subr.bf16.mxu0 0
    %1954 = vmatpush2.bf16.msra.mxu0 0
    %1955 = vmatprep.subr.bf16.mxu0 0
    %1956 = vmatpush2.bf16.msra.mxu0 0
    %1957 = vmatprep.subr.bf16.mxu0 0
    %1958 = vmatpush2.bf16.msra.mxu0 0
    %1959 = vmatprep.subr.bf16.mxu0 0
    %1960 = vmatpush2.bf16.msra.mxu0 0
    %1961 = vmatprep.mubr.bf16.mxu0 0
    %1962 = vmatmul.mubr.bf16.gmra.mxu0 %v1927
    %v1963 = vpop.f32.mrf.mxu0
    %v1964 = vadd.f32 %v1917, %v1963
    %v1965 = vpop.f32.mrf.mxu0
    %v1966 = vpop.f32.mrf.mxu0
    %v1967 = vpop.f32.mrf.mxu0
    %1968 = vdwg.mxu0
    %v1969 = vadd.f32 %v1964, %v794
    %v1970 = vxor.u32 %v1969, 2147483648
    %v1971 = vmul.f32 %v1970, 1.442695
    %v1972 = vpow.pop %v1971
    %v1973 = vadd.f32 %v1972, 1.0
    %v1974 = vrcp.pop %v1973
    %v1975 = vmul.f32 1.0, %v1974
    %v1976 = vtanh.pop %v1969
    %v1977 = vmul.f32 %v1975, %v1790
    %1979 = vrot.lane.b32.xlu0 %v1976, 64
    %v1980 = vpop.permute.xlu0 %1979
    %v1982 = vmul.f32 %v1975, %v1980
    %1984 = vrot.lane.b32.xlu0 %v1982, 32
    %v1985 = vpop.permute.xlu0 %1984
    %v1987 = vadd.f32 %v1977, %v1985
    %v1988 = vtanh.pop %v1987
    %1990 = vrot.lane.b32.xlu0 %v1988, 64
    %v1991 = vpop.permute.xlu0 %1990
    %v1993 = vmul.f32 %v1975, %v1991
    %v1994 = vpack.c.bf16 %v1993, %v1993
    %1996 = vrot.lane.b32.xlu0 %v1993, 32
    %v1997 = vpop.permute.xlu0 %1996
    %s1999 = scalar_lea.vmem [#allocation5], 10
    %2000 = vst.msk [vmem:[%s1999] sm:$0x3] %vm1018, %v1997
    %2001 = vmatprep.subr.bf16.mxu0 0
    %2002 = vmatpush1.bf16.msra.mxu0 0
    %2003 = vmatprep.subr.bf16.mxu0 0
    %2004 = vmatpush1.bf16.msra.mxu0 0
    %2005 = vmatprep.subr.bf16.mxu0 0
    %2006 = vmatpush1.bf16.msra.mxu0 0
    %2007 = vmatprep.subr.bf16.mxu0 0
    %2008 = vmatpush1.bf16.msra.mxu0 0
    %2009 = vmatprep.subr.bf16.mxu0 0
    %2010 = vmatpush1.bf16.msra.mxu0 0
    %2011 = vmatprep.subr.bf16.mxu0 0
    %2012 = vmatpush1.bf16.msra.mxu0 0
    %2013 = vmatprep.subr.bf16.mxu0 0
    %2014 = vmatpush1.bf16.msra.mxu0 %v805
    %2015 = vmatprep.subr.bf16.mxu0 0
    %2016 = vmatpush1.bf16.msra.mxu0 %v804
    %2017 = vmatprep.subr.bf16.mxu0 0
    %2018 = vmatpush2.bf16.msra.mxu0 0
    %2019 = vmatprep.subr.bf16.mxu0 0
    %2020 = vmatpush2.bf16.msra.mxu0 0
    %2021 = vmatprep.subr.bf16.mxu0 0
    %2022 = vmatpush2.bf16.msra.mxu0 0
    %2023 = vmatprep.subr.bf16.mxu0 0
    %2024 = vmatpush2.bf16.msra.mxu0 0
    %2025 = vmatprep.subr.bf16.mxu0 0
    %2026 = vmatpush2.bf16.msra.mxu0 0
    %2027 = vmatprep.subr.bf16.mxu0 0
    %2028 = vmatpush2.bf16.msra.mxu0 0
    %2029 = vmatprep.subr.bf16.mxu0 0
    %2030 = vmatpush2.bf16.msra.mxu0 0
    %2031 = vmatprep.subr.bf16.mxu0 0
    %2032 = vmatpush2.bf16.msra.mxu0 0
    %2033 = vmatprep.mubr.bf16.mxu0 0
    %2034 = vmatmul.mubr.bf16.gmra.mxu0 %v1927
    %v2035 = vpop.f32.mrf.mxu0
    %v2036 = vadd.f32 0.0, %v2035
    %v2037 = vpop.f32.mrf.mxu0
    %v2038 = vpop.f32.mrf.mxu0
    %v2039 = vpop.f32.mrf.mxu0
    %2040 = vdwg.mxu0
    %v2042 = vrot.slane %v2036, 4
    %v2044 = vadd.f32 %v774, %v2042
    %v2045 = vxor.u32 %v2044, 2147483648
    %v2046 = vmul.f32 %v2045, 1.442695
    %v2047 = vpow.pop %v2046
    %v2048 = vadd.f32 %v2047, 1.0
    %v2049 = vrcp.pop %v2048
    %v2050 = vmul.f32 1.0, %v2049
    %v2051 = vtanh.pop %v2044
    %v2053 = vrot.slane %v1868, 6
    %v2055 = vmul.f32 %v2050, %v2053
    %2057 = vrot.lane.b32.xlu0 %v2051, 64
    %v2058 = vpop.permute.xlu0 %2057
    %v2060 = vmul.f32 %v2050, %v2058
    %2062 = vrot.lane.b32.xlu0 %v2060, 32
    %v2063 = vpop.permute.xlu0 %2062
    %v2065 = vadd.f32 %v2055, %v2063
    %v2066 = vtanh.pop %v2065
    %2068 = vrot.lane.b32.xlu0 %v2066, 64
    %v2069 = vpop.permute.xlu0 %2068
    %v2071 = vmul.f32 %v2050, %v2069
    %v2072 = vpack.c.bf16 %v2071, %v2071
    %2074 = vrot.lane.b32.xlu0 %v1994, 32
    %v2075 = vpop.permute.xlu0 %2074
    %v2077 = vsel %vm808, %v2075, 0
    %2079 = vmatprep.subr.bf16.mxu0 0
    %2080 = vmatpush1.bf16.msra.mxu0 0
    %2081 = vmatprep.subr.bf16.mxu0 0
    %2082 = vmatpush1.bf16.msra.mxu0 0
    %2083 = vmatprep.subr.bf16.mxu0 0
    %2084 = vmatpush1.bf16.msra.mxu0 0
    %2085 = vmatprep.subr.bf16.mxu0 0
    %2086 = vmatpush1.bf16.msra.mxu0 0
    %2087 = vmatprep.subr.bf16.mxu0 0
    %2088 = vmatpush1.bf16.msra.mxu0 0
    %2089 = vmatprep.subr.bf16.mxu0 0
    %2090 = vmatpush1.bf16.msra.mxu0 0
    %2091 = vmatprep.subr.bf16.mxu0 0
    %2092 = vmatpush1.bf16.msra.mxu0 %v887
    %2093 = vmatprep.subr.bf16.mxu0 0
    %2094 = vmatpush1.bf16.msra.mxu0 %v886
    %2095 = vmatprep.subr.bf16.mxu0 0
    %2096 = vmatpush2.bf16.msra.mxu0 0
    %2097 = vmatprep.subr.bf16.mxu0 0
    %2098 = vmatpush2.bf16.msra.mxu0 0
    %2099 = vmatprep.subr.bf16.mxu0 0
    %2100 = vmatpush2.bf16.msra.mxu0 0
    %2101 = vmatprep.subr.bf16.mxu0 0
    %2102 = vmatpush2.bf16.msra.mxu0 0
    %2103 = vmatprep.subr.bf16.mxu0 0
    %2104 = vmatpush2.bf16.msra.mxu0 0
    %2105 = vmatprep.subr.bf16.mxu0 0
    %2106 = vmatpush2.bf16.msra.mxu0 0
    %2107 = vmatprep.subr.bf16.mxu0 0
    %2108 = vmatpush2.bf16.msra.mxu0 0
    %2109 = vmatprep.subr.bf16.mxu0 0
    %2110 = vmatpush2.bf16.msra.mxu0 0
    %2111 = vmatprep.mubr.bf16.mxu0 0
    %2112 = vmatmul.mubr.bf16.gmra.mxu0 %v2077
    %v2113 = vpop.f32.mrf.mxu0
    %v2114 = vadd.f32 0.0, %v2113
    %v2115 = vpop.f32.mrf.mxu0
    %v2116 = vpop.f32.mrf.mxu0
    %v2117 = vpop.f32.mrf.mxu0
    %2118 = vdwg.mxu0
    %v2120 = vrot.slane %v2072, 2
    %2121 = vrot.lane.b32.xlu0 %v2120, 32
    %v2122 = vpop.permute.xlu0 %2121
    %v2124 = vsel %vm808, %v2122, 0
    %2126 = vmatprep.subr.bf16.mxu0 0
    %2127 = vmatpush1.bf16.msra.mxu0 0
    %2128 = vmatprep.subr.bf16.mxu0 0
    %2129 = vmatpush1.bf16.msra.mxu0 0
    %2130 = vmatprep.subr.bf16.mxu0 0
    %2131 = vmatpush1.bf16.msra.mxu0 0
    %2132 = vmatprep.subr.bf16.mxu0 0
    %2133 = vmatpush1.bf16.msra.mxu0 0
    %2134 = vmatprep.subr.bf16.mxu0 0
    %2135 = vmatpush1.bf16.msra.mxu0 0
    %2136 = vmatprep.subr.bf16.mxu0 0
    %2137 = vmatpush1.bf16.msra.mxu0 0
    %2138 = vmatprep.subr.bf16.mxu0 0
    %2139 = vmatpush1.bf16.msra.mxu0 %v942
    %2140 = vmatprep.subr.bf16.mxu0 0
    %2141 = vmatpush1.bf16.msra.mxu0 %v941
    %2142 = vmatprep.subr.bf16.mxu0 0
    %2143 = vmatpush2.bf16.msra.mxu0 0
    %2144 = vmatprep.subr.bf16.mxu0 0
    %2145 = vmatpush2.bf16.msra.mxu0 0
    %2146 = vmatprep.subr.bf16.mxu0 0
    %2147 = vmatpush2.bf16.msra.mxu0 0
    %2148 = vmatprep.subr.bf16.mxu0 0
    %2149 = vmatpush2.bf16.msra.mxu0 0
    %2150 = vmatprep.subr.bf16.mxu0 0
    %2151 = vmatpush2.bf16.msra.mxu0 0
    %2152 = vmatprep.subr.bf16.mxu0 0
    %2153 = vmatpush2.bf16.msra.mxu0 0
    %2154 = vmatprep.subr.bf16.mxu0 0
    %2155 = vmatpush2.bf16.msra.mxu0 0
    %2156 = vmatprep.subr.bf16.mxu0 0
    %2157 = vmatpush2.bf16.msra.mxu0 0
    %2158 = vmatprep.mubr.bf16.mxu0 0
    %2159 = vmatmul.mubr.bf16.gmra.mxu0 %v2124
    %v2160 = vpop.f32.mrf.mxu0
    %v2161 = vadd.f32 %v2114, %v2160
    %v2162 = vpop.f32.mrf.mxu0
    %v2163 = vpop.f32.mrf.mxu0
    %v2164 = vpop.f32.mrf.mxu0
    %2165 = vdwg.mxu0
    %v2166 = vadd.f32 %v2161, %v794
    %v2167 = vxor.u32 %v2166, 2147483648
    %v2168 = vmul.f32 %v2167, 1.442695
    %v2169 = vpow.pop %v2168
    %v2170 = vadd.f32 %v2169, 1.0
    %v2171 = vrcp.pop %v2170
    %v2172 = vmul.f32 1.0, %v2171
    %v2173 = vtanh.pop %v2166
    %v2174 = vmul.f32 %v2172, %v1987
    %2176 = vrot.lane.b32.xlu0 %v2173, 64
    %v2177 = vpop.permute.xlu0 %2176
    %v2179 = vmul.f32 %v2172, %v2177
    %2181 = vrot.lane.b32.xlu0 %v2179, 32
    %v2182 = vpop.permute.xlu0 %2181
    %v2184 = vadd.f32 %v2174, %v2182
    %v2185 = vtanh.pop %v2184
    %2187 = vrot.lane.b32.xlu0 %v2185, 64
    %v2188 = vpop.permute.xlu0 %2187
    %v2190 = vmul.f32 %v2172, %v2188
    %v2191 = vpack.c.bf16 %v2190, %v2190
    %2193 = vrot.lane.b32.xlu0 %v2190, 32
    %v2194 = vpop.permute.xlu0 %2193
    %s2196 = scalar_lea.vmem [#allocation5], 12
    %2197 = vst.msk [vmem:[%s2196] sm:$0x3] %vm1018, %v2194
    %2198 = vmatprep.subr.bf16.mxu0 0
    %2199 = vmatpush1.bf16.msra.mxu0 0
    %2200 = vmatprep.subr.bf16.mxu0 0
    %2201 = vmatpush1.bf16.msra.mxu0 0
    %2202 = vmatprep.subr.bf16.mxu0 0
    %2203 = vmatpush1.bf16.msra.mxu0 0
    %2204 = vmatprep.subr.bf16.mxu0 0
    %2205 = vmatpush1.bf16.msra.mxu0 0
    %2206 = vmatprep.subr.bf16.mxu0 0
    %2207 = vmatpush1.bf16.msra.mxu0 0
    %2208 = vmatprep.subr.bf16.mxu0 0
    %2209 = vmatpush1.bf16.msra.mxu0 0
    %2210 = vmatprep.subr.bf16.mxu0 0
    %2211 = vmatpush1.bf16.msra.mxu0 %v805
    %2212 = vmatprep.subr.bf16.mxu0 0
    %2213 = vmatpush1.bf16.msra.mxu0 %v804
    %2214 = vmatprep.subr.bf16.mxu0 0
    %2215 = vmatpush2.bf16.msra.mxu0 0
    %2216 = vmatprep.subr.bf16.mxu0 0
    %2217 = vmatpush2.bf16.msra.mxu0 0
    %2218 = vmatprep.subr.bf16.mxu0 0
    %2219 = vmatpush2.bf16.msra.mxu0 0
    %2220 = vmatprep.subr.bf16.mxu0 0
    %2221 = vmatpush2.bf16.msra.mxu0 0
    %2222 = vmatprep.subr.bf16.mxu0 0
    %2223 = vmatpush2.bf16.msra.mxu0 0
    %2224 = vmatprep.subr.bf16.mxu0 0
    %2225 = vmatpush2.bf16.msra.mxu0 0
    %2226 = vmatprep.subr.bf16.mxu0 0
    %2227 = vmatpush2.bf16.msra.mxu0 0
    %2228 = vmatprep.subr.bf16.mxu0 0
    %2229 = vmatpush2.bf16.msra.mxu0 0
    %2230 = vmatprep.mubr.bf16.mxu0 0
    %2231 = vmatmul.mubr.bf16.gmra.mxu0 %v2124
    %v2232 = vpop.f32.mrf.mxu0
    %v2233 = vadd.f32 0.0, %v2232
    %v2234 = vpop.f32.mrf.mxu0
    %v2235 = vpop.f32.mrf.mxu0
    %v2236 = vpop.f32.mrf.mxu0
    %2237 = vdwg.mxu0
    %v2239 = vrot.slane %v2233, 2
    %v2241 = vadd.f32 %v774, %v2239
    %v2242 = vxor.u32 %v2241, 2147483648
    %v2243 = vmul.f32 %v2242, 1.442695
    %v2244 = vpow.pop %v2243
    %v2245 = vadd.f32 %v2244, 1.0
    %v2246 = vrcp.pop %v2245
    %v2247 = vmul.f32 1.0, %v2246
    %v2248 = vtanh.pop %v2241
    %v2250 = vrot.slane %v2065, 6
    %v2252 = vmul.f32 %v2247, %v2250
    %2254 = vrot.lane.b32.xlu0 %v2248, 64
    %v2255 = vpop.permute.xlu0 %2254
    %v2257 = vmul.f32 %v2247, %v2255
    %2259 = vrot.lane.b32.xlu0 %v2257, 32
    %v2260 = vpop.permute.xlu0 %2259
    %v2262 = vadd.f32 %v2252, %v2260
    %v2263 = vtanh.pop %v2262
    %2265 = vrot.lane.b32.xlu0 %v2263, 64
    %v2266 = vpop.permute.xlu0 %2265
    %v2268 = vmul.f32 %v2247, %v2266
    %v2269 = vpack.c.bf16 %v2268, %v2268
    %2271 = vrot.lane.b32.xlu0 %v2191, 32
    %v2272 = vpop.permute.xlu0 %2271
    %v2274 = vsel %vm808, %v2272, 0
    %2276 = vmatprep.subr.bf16.mxu0 0
    %2277 = vmatpush1.bf16.msra.mxu0 0
    %2278 = vmatprep.subr.bf16.mxu0 0
    %2279 = vmatpush1.bf16.msra.mxu0 0
    %2280 = vmatprep.subr.bf16.mxu0 0
    %2281 = vmatpush1.bf16.msra.mxu0 0
    %2282 = vmatprep.subr.bf16.mxu0 0
    %2283 = vmatpush1.bf16.msra.mxu0 0
    %2284 = vmatprep.subr.bf16.mxu0 0
    %2285 = vmatpush1.bf16.msra.mxu0 0
    %2286 = vmatprep.subr.bf16.mxu0 0
    %2287 = vmatpush1.bf16.msra.mxu0 0
    %2288 = vmatprep.subr.bf16.mxu0 0
    %2289 = vmatpush1.bf16.msra.mxu0 %v887
    %2290 = vmatprep.subr.bf16.mxu0 0
    %2291 = vmatpush1.bf16.msra.mxu0 %v886
    %2292 = vmatprep.subr.bf16.mxu0 0
    %2293 = vmatpush2.bf16.msra.mxu0 0
    %2294 = vmatprep.subr.bf16.mxu0 0
    %2295 = vmatpush2.bf16.msra.mxu0 0
    %2296 = vmatprep.subr.bf16.mxu0 0
    %2297 = vmatpush2.bf16.msra.mxu0 0
    %2298 = vmatprep.subr.bf16.mxu0 0
    %2299 = vmatpush2.bf16.msra.mxu0 0
    %2300 = vmatprep.subr.bf16.mxu0 0
    %2301 = vmatpush2.bf16.msra.mxu0 0
    %2302 = vmatprep.subr.bf16.mxu0 0
    %2303 = vmatpush2.bf16.msra.mxu0 0
    %2304 = vmatprep.subr.bf16.mxu0 0
    %2305 = vmatpush2.bf16.msra.mxu0 0
    %2306 = vmatprep.subr.bf16.mxu0 0
    %2307 = vmatpush2.bf16.msra.mxu0 0
    %2308 = vmatprep.mubr.bf16.mxu0 0
    %2309 = vmatmul.mubr.bf16.gmra.mxu0 %v2274
    %v2310 = vpop.f32.mrf.mxu0
    %v2311 = vadd.f32 0.0, %v2310
    %v2312 = vpop.f32.mrf.mxu0
    %v2313 = vpop.f32.mrf.mxu0
    %v2314 = vpop.f32.mrf.mxu0
    %2315 = vdwg.mxu0
    %v2317 = vrot.slane %v2269, 3
    %2318 = vrot.lane.b32.xlu0 %v2317, 32
    %v2319 = vpop.permute.xlu0 %2318
    %v2321 = vsel %vm808, %v2319, 0
    %2323 = vmatprep.subr.bf16.mxu0 0
    %2324 = vmatpush1.bf16.msra.mxu0 0
    %2325 = vmatprep.subr.bf16.mxu0 0
    %2326 = vmatpush1.bf16.msra.mxu0 0
    %2327 = vmatprep.subr.bf16.mxu0 0
    %2328 = vmatpush1.bf16.msra.mxu0 0
    %2329 = vmatprep.subr.bf16.mxu0 0
    %2330 = vmatpush1.bf16.msra.mxu0 0
    %2331 = vmatprep.subr.bf16.mxu0 0
    %2332 = vmatpush1.bf16.msra.mxu0 0
    %2333 = vmatprep.subr.bf16.mxu0 0
    %2334 = vmatpush1.bf16.msra.mxu0 0
    %2335 = vmatprep.subr.bf16.mxu0 0
    %2336 = vmatpush1.bf16.msra.mxu0 %v942
    %2337 = vmatprep.subr.bf16.mxu0 0
    %2338 = vmatpush1.bf16.msra.mxu0 %v941
    %2339 = vmatprep.subr.bf16.mxu0 0
    %2340 = vmatpush2.bf16.msra.mxu0 0
    %2341 = vmatprep.subr.bf16.mxu0 0
    %2342 = vmatpush2.bf16.msra.mxu0 0
    %2343 = vmatprep.subr.bf16.mxu0 0
    %2344 = vmatpush2.bf16.msra.mxu0 0
    %2345 = vmatprep.subr.bf16.mxu0 0
    %2346 = vmatpush2.bf16.msra.mxu0 0
    %2347 = vmatprep.subr.bf16.mxu0 0
    %2348 = vmatpush2.bf16.msra.mxu0 0
    %2349 = vmatprep.subr.bf16.mxu0 0
    %2350 = vmatpush2.bf16.msra.mxu0 0
    %2351 = vmatprep.subr.bf16.mxu0 0
    %2352 = vmatpush2.bf16.msra.mxu0 0
    %2353 = vmatprep.subr.bf16.mxu0 0
    %2354 = vmatpush2.bf16.msra.mxu0 0
    %2355 = vmatprep.mubr.bf16.mxu0 0
    %2356 = vmatmul.mubr.bf16.gmra.mxu0 %v2321
    %v2357 = vpop.f32.mrf.mxu0
    %v2358 = vadd.f32 %v2311, %v2357
    %v2359 = vpop.f32.mrf.mxu0
    %v2360 = vpop.f32.mrf.mxu0
    %v2361 = vpop.f32.mrf.mxu0
    %2362 = vdwg.mxu0
    %v2363 = vadd.f32 %v2358, %v794
    %v2364 = vxor.u32 %v2363, 2147483648
    %v2365 = vmul.f32 %v2364, 1.442695
    %v2366 = vpow.pop %v2365
    %v2367 = vadd.f32 %v2366, 1.0
    %v2368 = vrcp.pop %v2367
    %v2369 = vmul.f32 1.0, %v2368
    %v2370 = vtanh.pop %v2363
    %v2371 = vmul.f32 %v2369, %v2184
    %2373 = vrot.lane.b32.xlu0 %v2370, 64
    %v2374 = vpop.permute.xlu0 %2373
    %v2376 = vmul.f32 %v2369, %v2374
    %2378 = vrot.lane.b32.xlu0 %v2376, 32
    %v2379 = vpop.permute.xlu0 %2378
    %v2381 = vadd.f32 %v2371, %v2379
    %v2382 = vtanh.pop %v2381
    %2384 = vrot.lane.b32.xlu0 %v2382, 64
    %v2385 = vpop.permute.xlu0 %2384
    %v2387 = vmul.f32 %v2369, %v2385
    %2389 = vrot.lane.b32.xlu0 %v2387, 32
    %v2390 = vpop.permute.xlu0 %2389
    %s2392 = scalar_lea.vmem [#allocation5], 14
    %2393 = vst.msk [vmem:[%s2392] sm:$0x3] %vm1018, %v2390
    %2395 = vrot.lane.b32.xlu0 %v2268, 32
    %v2396 = vpop.permute.xlu0 %2395
    %vm2398 = vcmask 261126
    %2399 = vst.msk [vmem:[#allocation6 - $0x6] sm:$0xc0] %vm2398, %v2396
    %s2400 = scalar_lea.vmem [#allocation6], 2
    %2401 = vst.msk [vmem:[%s2400] sm:$0x3] %vm1018, %v2390
    %2403 = vrot.lane.b32.xlu0 %v2262, 96
    %v2404 = vpop.permute.xlu0 %2403
    %2406 = vst.msk [vmem:[#allocation8 - $0x6] sm:$0xc0] %vm2398, %v2404
    %2408 = vrot.lane.b32.xlu0 %v2381, 96
    %v2409 = vpop.permute.xlu0 %2408
    %s2411 = scalar_lea.vmem [#allocation8], 2
    %2412 = vst.msk [vmem:[%s2411] sm:$0x3] %vm1018, %v2409
    // Predicated region
    $region34: #{lstm_forward.1} parent=1 // pred_check
      _
    $region35: #{lstm_forward.1} parent=1 // pred_check_branch
      %2414 = sbr.rel (0) target = $region37
    $region36: #{lstm_forward.1} parent=1 // pred_region
      %s2416 = ssub.s32 256, 256
      %2417 = vsyncadd [#allocation4], %s2416
      %s2418 = sshll.u32 [#allocation5], 4
      %s2419 = int_to_ptr.vmem [resolvable:$true] %s2418
      %2424 = dma.vmem_to_hbm [thread:$0]  %s2419, 256, %s7, [#allocation4], 32, 32, 2
    $region37: #{lstm_forward.1} parent=1 // pred_fallthru
      _
    // Predicated region
    $region38: #{lstm_forward.1} parent=1 // pred_check
      _
    $region39: #{lstm_forward.1} parent=1 // pred_check_branch
      %2426 = sbr.rel (0) target = $region41
    $region40: #{lstm_forward.1} parent=1 // pred_region
      %s2428 = ssub.s32 64, 64
      %2429 = vsyncadd [#allocation7], %s2428
      %s2430 = sshll.u32 [#allocation6], 4
      %s2431 = int_to_ptr.vmem [resolvable:$true] %s2430
      %2436 = dma.vmem_to_hbm [thread:$0]  %s2431, 64, %s8, [#allocation7], 32, 32, 2
    $region41: #{lstm_forward.1} parent=1 // pred_fallthru
      _
    // Predicated region
    $region42: #{lstm_forward.1} parent=1 // pred_check
      _
    $region43: #{lstm_forward.1} parent=1 // pred_check_branch
      %2438 = sbr.rel (0) target = $region45
    $region44: #{lstm_forward.1} parent=1 // pred_region
      %s2440 = ssub.s32 64, 64
      %2441 = vsyncadd [#allocation7], %s2440
      %s2442 = sshll.u32 [#allocation8], 4
      %s2443 = int_to_ptr.vmem [resolvable:$true] %s2442
      %2448 = dma.vmem_to_hbm [thread:$0]  %s2443, 64, %s9, [#allocation7], 32, 32, 2
    $region45: #{lstm_forward.1} parent=1 // pred_fallthru
      _
    // Predicated region
    $region46: #{lstm_forward.1} parent=1 // pred_check
      _
    $region47: #{lstm_forward.1} parent=1 // pred_check_branch
      %2450 = sbr.rel (0) target = $region49
    $region48: #{lstm_forward.1} parent=1 // pred_region
      %2451 = dma.done [#allocation4], 256
    $region49: #{lstm_forward.1} parent=1 // pred_fallthru
      _
    // Predicated region
    $region50: #{lstm_forward.1} parent=1 // pred_check
      _
    $region51: #{lstm_forward.1} parent=1 // pred_check_branch
      %2453 = sbr.rel (0) target = $region53
    $region52: #{lstm_forward.1} parent=1 // pred_region
      %2454 = dma.done [#allocation7], 64
    $region53: #{lstm_forward.1} parent=1 // pred_fallthru
      _
    // Predicated region
    $region54: #{lstm_forward.1} parent=1 // pred_check
      _
    $region55: #{lstm_forward.1} parent=1 // pred_check_branch
      %2456 = sbr.rel (0) target = $region57
    $region56: #{lstm_forward.1} parent=1 // pred_region
      %2457 = dma.done [#allocation7], 64
    $region57: #{lstm_forward.1} parent=1 // pred_fallthru
      _
    %2458 = vsyncpa [#allocation3], 1
    %2459 = vsyncpa [#allocation4], 1
    %2460 = vsyncpa [#allocation7], 1

</llo_original>
